<compile_context>
chip_gen: v7x
topology: tpu7x:2x2x1
jax: 0.10.0
libtpu: 0.0.40
codegen_flags: <defaults>
</compile_context>

<pallas_src>
import functools

import jax
import jax.numpy as jnp
from jax.experimental import pallas as pl
from jax.experimental.pallas import tpu as pltpu

LANE = 128


def _round_up(n, m):
    return ((n + m - 1) // m) * m


# ----------------------------------------------------------------------------
# Pallas kernels
# ----------------------------------------------------------------------------

def _init_conv_kernel(x_ref, w_ref, b_ref, out_ref, *, k, L, pad_max, pad_init):
    """Init 'same' conv (dilation 1). Writes a length-padded output (halo zeros)."""
    Cp = out_ref.shape[-1]
    xs = [x_ref[0, pl.ds(pad_max - pad_init + t, L), :] for t in range(k)]
    xcat = jnp.concatenate(xs, axis=-1).astype(jnp.float32)          # (L, k*Cp)
    y = jnp.dot(xcat, w_ref[...].astype(jnp.float32),
                preferred_element_type=jnp.float32) + b_ref[...].astype(jnp.float32)
    zeros_halo = jnp.zeros((pad_max, Cp), out_ref.dtype)
    out_ref[0, 0, pl.ds(0, pad_max), :] = zeros_halo
    out_ref[0, 0, pl.ds(pad_max + L, pad_max), :] = zeros_halo
    out_ref[0, 0, pl.ds(pad_max, L), :] = y.astype(out_ref.dtype)


def _stack_kernel(starts_ref, x_ref, w_ref, b_ref, out_ref, *, k, L, pad_max):
    """Fused res block for one (layer, batch) grid step of a non-last stack.

    Single matmul: [x_tap0 .. x_tap{k-1} | x] @ [[Wc|0];[0|Wr]] -> [h | res].
    Output is written length-padded (halo zeros) so the next stack reads it as-is.
    """
    li = pl.program_id(0)
    Cp = out_ref.shape[-1]
    xs = [x_ref[0, 0, pl.ds(starts_ref[li, t], L), :] for t in range(k)]
    xs.append(x_ref[0, 0, pl.ds(pad_max, L), :])                     # unpadded x
    xcat = jnp.concatenate(xs, axis=-1).astype(jnp.float32)          # (L, (k+1)*Cp)
    z = jnp.dot(xcat, w_ref[0].astype(jnp.float32),
                preferred_element_type=jnp.float32) + b_ref[0].astype(jnp.float32)
    h = z[:, :Cp]
    res = z[:, Cp:]
    y = jnp.tanh(h) * jax.nn.sigmoid(h) + res
    zeros_halo = jnp.zeros((pad_max, Cp), out_ref.dtype)
    out_ref[0, 0, pl.ds(0, pad_max), :] = zeros_halo
    out_ref[0, 0, pl.ds(pad_max + L, pad_max), :] = zeros_halo
    out_ref[0, 0, pl.ds(pad_max, L), :] = y.astype(out_ref.dtype)


def _last_stack_kernel(starts_ref, x_ref, w_ref, b_ref, ws_ref, bs_ref,
                       wf_ref, bf_ref, out_ref, acc_ref, *, k, L, pad_max):
    """Last stack: res block + skip conv, skip summed over layers in VMEM scratch,
    final 1x1 conv applied at the last layer. grid=(B, layers), layers arbitrary."""
    li = pl.program_id(1)
    Cp = out_ref.shape[-1]

    @pl.when(li == 0)
    def _():
        acc_ref[...] = jnp.zeros_like(acc_ref)

    xs = [x_ref[0, 0, pl.ds(starts_ref[li, t], L), :] for t in range(k)]
    xs.append(x_ref[0, 0, pl.ds(pad_max, L), :])
    xcat = jnp.concatenate(xs, axis=-1).astype(jnp.float32)
    z = jnp.dot(xcat, w_ref[0].astype(jnp.float32),
                preferred_element_type=jnp.float32) + b_ref[0].astype(jnp.float32)
    h = z[:, :Cp]
    res = z[:, Cp:]
    y = jnp.tanh(h) * jax.nn.sigmoid(h) + res
    skip = jnp.dot(y, ws_ref[0].astype(jnp.float32),
                   preferred_element_type=jnp.float32) + bs_ref[0].astype(jnp.float32)
    acc_ref[...] += skip

    @pl.when(li == pl.num_programs(1) - 1)
    def _():
        out = jnp.dot(acc_ref[...], wf_ref[...].astype(jnp.float32),
                      preferred_element_type=jnp.float32) + bf_ref[...].astype(jnp.float32)
        out_ref[0] = out.astype(out_ref.dtype)


# ----------------------------------------------------------------------------
# pallas_call wrappers
# ----------------------------------------------------------------------------

def _init_conv_call(xpad, w_flat, b, *, k, L, pad_max, pad_init):
    B, Lp, Cp = xpad.shape
    kernel = functools.partial(_init_conv_kernel, k=k, L=L,
                               pad_max=pad_max, pad_init=pad_init)
    return pl.pallas_call(
        kernel,
        out_shape=jax.ShapeDtypeStruct((1, B, Lp, Cp), xpad.dtype),
        grid=(B,),
        in_specs=[
            pl.BlockSpec((1, Lp, Cp), lambda bi: (bi, 0, 0)),
            pl.BlockSpec((k * Cp, Cp), lambda bi: (0, 0)),
            pl.BlockSpec((1, Cp), lambda bi: (0, 0)),
        ],
        out_specs=pl.BlockSpec((1, 1, Lp, Cp), lambda bi: (0, bi, 0, 0)),
        compiler_params=pltpu.CompilerParams(dimension_semantics=("parallel",)),
    )(xpad, w_flat, b)


def _stack_call(x_in, w_comb, b_comb, starts, *, k, L, pad_max, broadcast_input):
    _, B, Lp, Cp = x_in.shape
    layers = w_comb.shape[0]
    kernel = functools.partial(_stack_kernel, k=k, L=L, pad_max=pad_max)
    if broadcast_input:
        x_map = lambda li, bi, s: (0, bi, 0, 0)
    else:
        x_map = lambda li, bi, s: (li, bi, 0, 0)
    return pl.pallas_call(
        kernel,
        out_shape=jax.ShapeDtypeStruct((layers, B, Lp, Cp), x_in.dtype),
        grid_spec=pltpu.PrefetchScalarGridSpec(
            num_scalar_prefetch=1,
            grid=(layers, B),
            in_specs=[
                pl.BlockSpec((1, 1, Lp, Cp), x_map),
                pl.BlockSpec((1, (k + 1) * Cp, 2 * Cp), lambda li, bi, s: (li, 0, 0)),
                pl.BlockSpec((1, 1, 2 * Cp), lambda li, bi, s: (li, 0, 0)),
            ],
            out_specs=pl.BlockSpec((1, 1, Lp, Cp), lambda li, bi, s: (li, bi, 0, 0)),
        ),
        compiler_params=pltpu.CompilerParams(
            dimension_semantics=("parallel", "parallel")),
    )(starts, x_in, w_comb, b_comb)


def _last_stack_call(x_in, w_comb, b_comb, ws, bs, wf, bf, starts, *,
                     k, L, pad_max, broadcast_input):
    _, B, Lp, Cp = x_in.shape
    layers = w_comb.shape[0]
    kernel = functools.partial(_last_stack_kernel, k=k, L=L, pad_max=pad_max)
    if broadcast_input:
        x_map = lambda bi, li, s: (0, bi, 0, 0)
    else:
        x_map = lambda bi, li, s: (li, bi, 0, 0)
    return pl.pallas_call(
        kernel,
        out_shape=jax.ShapeDtypeStruct((B, L, Cp), x_in.dtype),
        grid_spec=pltpu.PrefetchScalarGridSpec(
            num_scalar_prefetch=1,
            grid=(B, layers),                      # reduction (layers) axis last
            in_specs=[
                pl.BlockSpec((1, 1, Lp, Cp), x_map),
                pl.BlockSpec((1, (k + 1) * Cp, 2 * Cp), lambda bi, li, s: (li, 0, 0)),
                pl.BlockSpec((1, 1, 2 * Cp), lambda bi, li, s: (li, 0, 0)),
                pl.BlockSpec((1, Cp, Cp), lambda bi, li, s: (li, 0, 0)),
                pl.BlockSpec((1, 1, Cp), lambda bi, li, s: (li, 0, 0)),
                pl.BlockSpec((Cp, Cp), lambda bi, li, s: (0, 0)),
                pl.BlockSpec((1, Cp), lambda bi, li, s: (0, 0)),
            ],
            out_specs=pl.BlockSpec((1, L, Cp), lambda bi, li, s: (bi, 0, 0)),
            scratch_shapes=[pltpu.VMEM((L, Cp), jnp.float32)],
        ),
        compiler_params=pltpu.CompilerParams(
            dimension_semantics=("parallel", "arbitrary")),
    )(starts, x_in, w_comb, b_comb, ws, bs, wf, bf)


# ----------------------------------------------------------------------------
# Parameter packing (pad channels to 128 lanes, fuse conv taps + residual 1x1)
# ----------------------------------------------------------------------------

def _pad_channels(a, axes, Cp):
    cfg = [(0, 0)] * a.ndim
    for ax in axes:
        cfg[ax] = (0, Cp - a.shape[ax])
    return jnp.pad(a, cfg)


def prepare_wavenet_params(params, Cp):
    k_init = params["init_w"].shape[0]
    wi = _pad_channels(params["init_w"], (1, 2), Cp).reshape(k_init * Cp, Cp)
    bi = _pad_channels(params["init_b"], (1,), Cp)
    prepped = {"init_w": wi, "init_b": bi, "stacks": []}

    for stack in params["stacks"]:
        blocks = stack["blocks"]
        k = blocks[0]["conv_w"].shape[0]
        w_comb, b_comb, ws_list, bs_list = [], [], [], []
        for blk in blocks:
            wc = _pad_channels(blk["conv_w"], (1, 2), Cp)            # (k, Cp, Cp)
            wr = _pad_channels(blk["res_w"], (0, 1), Cp)             # (Cp, Cp)
            # fused weight ((k+1)*Cp, 2*Cp): cols [0:Cp]=dilated conv (h),
            # cols [Cp:2Cp]=residual 1x1.
            w = jnp.zeros(((k + 1) * Cp, 2 * Cp), jnp.float32)
            w = w.at[:k * Cp, :Cp].set(wc.reshape(k * Cp, Cp))
            w = w.at[k * Cp:, Cp:].set(wr)
            bc = _pad_channels(blk["conv_b"], (1,), Cp)
            br = _pad_channels(blk["res_b"], (1,), Cp)
            w_comb.append(w)
            b_comb.append(jnp.concatenate([bc, br], axis=-1))        # (1, 2Cp)
            if "skip_w" in blk:
                ws_list.append(_pad_channels(blk["skip_w"], (0, 1), Cp))
                bs_list.append(_pad_channels(blk["skip_b"], (1,), Cp))
        sp = {"w": jnp.stack(w_comb), "b": jnp.stack(b_comb), "k": k}
        if ws_list:
            sp["ws"] = jnp.stack(ws_list)
            sp["bs"] = jnp.stack(bs_list)
        prepped["stacks"].append(sp)

    prepped["final_w"] = _pad_channels(params["final_w"], (0, 1), Cp)
    prepped["final_b"] = _pad_channels(params["final_b"], (1,), Cp)
    return prepped


# ----------------------------------------------------------------------------
# Full Wavenet forward (Pallas path)
# ----------------------------------------------------------------------------

def wavenet_forward(x_ncl, params):
    """x_ncl: (B, C, L) like the PyTorch module. Returns (B, C, L)."""
    B, C, L = x_ncl.shape
    Cp = max(LANE, _round_up(C, LANE))
    layers = len(params["stacks"][0]["blocks"])
    k = params["stacks"][0]["blocks"][0]["conv_w"].shape[0]
    k_init = params["init_w"].shape[0]
    pad_init = (k_init - 1) // 2
    max_dil = 2 ** (layers - 1)
    pad_needed = max(pad_init, max_dil * (k - 1) // 2)
    pad_max = _round_up(max(pad_needed, 1), 8)       # sublane-aligned halo / stores
    Lp = L + 2 * pad_max

    pp = prepare_wavenet_params(params, Cp)

    # Single pad of the input: length halo to pad_max, channels to Cp, NLC layout.
    x = jnp.transpose(x_ncl, (0, 2, 1))              # (B, L, C)
    xpad = jnp.pad(x, ((0, 0), (pad_max, pad_max), (0, Cp - C)))

    # Per-layer tap start offsets (scalar-prefetched into SMEM).
    starts_list = []
    for li in range(layers):
        d = 2 ** li
        p = d * (k - 1) // 2
        starts_list.append([pad_max - p + t * d for t in range(k)])
    starts = jnp.asarray(starts_list, dtype=jnp.int32)   # (layers, k)

    # Init conv -> (1, B, Lp, Cp), broadcast to all layers of the first stack.
    cur = _init_conv_call(xpad, pp["init_w"], pp["init_b"],
                          k=k_init, L=L, pad_max=pad_max, pad_init=pad_init)

    broadcast = True
    for sp in pp["stacks"][:-1]:
        cur = _stack_call(cur, sp["w"], sp["b"], starts,
                          k=sp["k"], L=L, pad_max=pad_max,
                          broadcast_input=broadcast)
        broadcast = False

    last = pp["stacks"][-1]
    out = _last_stack_call(cur, last["w"], last["b"], last["ws"], last["bs"],
                           pp["final_w"], pp["final_b"], starts,
                           k=last["k"], L=L, pad_max=pad_max,
                           broadcast_input=broadcast)
    return jnp.transpose(out[:, :, :C], (0, 2, 1))   # back to (B, C, L)


# ----------------------------------------------------------------------------
# Pure-JAX reference (same math) for validation
# ----------------------------------------------------------------------------

def _conv1d_ref(x, w, b, dilation):
    k = w.shape[0]
    pad = dilation * (k - 1) // 2
    L = x.shape[1]
    xpad = jnp.pad(x, ((0, 0), (pad, pad), (0, 0)))
    acc = 0.0
    for tap in range(k):
        acc = acc + jnp.einsum("blc,cd->bld",
                               xpad[:, tap * dilation: tap * dilation + L, :], w[tap])
    return acc + b[None]


def _pointwise_ref(x, w, b):
    return jnp.einsum("blc,cd->bld", x, w) + b[None]


def _resblock_ref(x, blk, dilation, has_skip):
    res = _pointwise_ref(x, blk["res_w"], blk["res_b"])
    h = _conv1d_ref(x, blk["conv_w"], blk["conv_b"], dilation)
    y = jnp.tanh(h) * jax.nn.sigmoid(h) + res
    skip = _pointwise_ref(y, blk["skip_w"], blk["skip_b"]) if has_skip else None
    return y, skip


def wavenet_ref(x_ncl, params):
    x = jnp.transpose(x_ncl, (0, 2, 1))
    x = _conv1d_ref(x, params["init_w"], params["init_b"], 1)
    n_stacks = len(params["stacks"])
    layers = len(params["stacks"][0]["blocks"])
    inputs = [x] * layers
    stacked = None
    for si, stack in enumerate(params["stacks"]):
        is_last = si == n_stacks - 1
        if is_last:
            skips = [_resblock_ref(inputs[li], blk, 2 ** li, True)[1]
                     for li, blk in enumerate(stack["blocks"])]
            stacked = jnp.stack(skips)
        else:
            inputs = [_resblock_ref(inputs[li], blk, 2 ** li, False)[0]
                      for li, blk in enumerate(stack["blocks"])]
    summed = jnp.sum(stacked, axis=0)
    out = _pointwise_ref(summed, params["final_w"], params["final_b"])
    return jnp.transpose(out, (0, 2, 1))


# ----------------------------------------------------------------------------
# Deterministic parameter init (matches the module's shapes; no checkpoint)
# ----------------------------------------------------------------------------

def init_params(key, dim, stacks, layers, init_conv_kernel=3, kernel_size=3):
    def nrm(kk, shape, fan_in):
        return (jax.random.normal(kk, shape, jnp.float32) / jnp.sqrt(fan_in)).astype(jnp.float32)

    keys = iter(jax.random.split(key, 4 + stacks * layers * 6))
    params = {
        "init_w": nrm(next(keys), (init_conv_kernel, dim, dim), dim * init_conv_kernel),
        "init_b": nrm(next(keys), (1, dim), dim),
        "final_w": nrm(next(keys), (dim, dim), dim),
        "final_b": nrm(next(keys), (1, dim), dim),
        "stacks": [],
    }
    for si in range(stacks):
        is_last = si == stacks - 1
        blocks = []
        for _ in range(layers):
            blk = {
                "conv_w": nrm(next(keys), (kernel_size, dim, dim), dim * kernel_size),
                "conv_b": nrm(next(keys), (1, dim), dim),
                "res_w": nrm(next(keys), (dim, dim), dim),
                "res_b": nrm(next(keys), (1, dim), dim),
            }
            if is_last:
                blk["skip_w"] = nrm(next(keys), (dim, dim), dim)
                blk["skip_b"] = nrm(next(keys), (1, dim), dim)
            blocks.append(blk)
        params["stacks"].append({"blocks": blocks})
    return params


# ----------------------------------------------------------------------------
# main
# ----------------------------------------------------------------------------

if __name__ == "__main__":
    B, C, L = 2, 16, 32           # batch, channels (dim), sequence length
    STACKS, LAYERS = 2, 3         # dilations per stack: 1, 2, 4

    key = jax.random.PRNGKey(0)
    kx, kp = jax.random.split(key)
    x = jax.random.normal(kx, (B, C, L), jnp.float32)   # PyTorch NCL layout
    params = init_params(kp, C, STACKS, LAYERS, init_conv_kernel=3, kernel_size=3)

    out = jax.jit(wavenet_forward)(x, params)
    out = jax.block_until_ready(out)

    ref = wavenet_ref(x, params)
    assert out.shape == (B, C, L), out.shape
    max_err = float(jnp.max(jnp.abs(out - ref)))
    assert max_err < 2e-3, f"mismatch vs reference: {max_err}"

    print("KERNEL_OK")
</pallas_src>

<mosaic_0001>
module attributes {stable_mosaic.version = 11 : i64} {
  func.func @_stack_kernel(%arg0: i32, %arg1: i32, %arg2: memref<3x3xi32, #tpu.memory_space<smem>>, %arg3: memref<1x1x48x128xf32, #tpu.memory_space<vmem>>, %arg4: memref<1x512x256xf32, #tpu.memory_space<vmem>>, %arg5: memref<1x1x256xf32, #tpu.memory_space<vmem>>, %arg6: memref<1x1x48x128xf32, #tpu.memory_space<vmem>>) attributes {dimension_semantics = [#tpu.dimension_semantics<parallel>, #tpu.dimension_semantics<parallel>], iteration_bounds = array<i64: 3, 2>, scalar_prefetch = 1 : i64, scratch_operands = 0 : i64, tpu.core_type = #tpu.core_type<tc>, window_params = [{transform_indices = @transform_0, window_bounds = array<i64: 1, 1, 48, 128>}, {transform_indices = @transform_1, window_bounds = array<i64: 1, 512, 256>}, {transform_indices = @transform_2, window_bounds = array<i64: 1, 1, 256>}, {transform_indices = @transform_3, window_bounds = array<i64: 1, 1, 48, 128>}]} {
    %0 = arith.index_cast %arg0 : i32 to index
    %c0 = arith.constant 0 : index
    %1 = memref.load %arg2[%0, %c0] : memref<3x3xi32, #tpu.memory_space<smem>>
    %c0_0 = arith.constant 0 : index
    %c0_1 = arith.constant 0 : index
    %2 = arith.index_cast %1 : i32 to index
    %c0_2 = arith.constant 0 : index
    %3 = vector.load %arg3[%c0_0, %c0_1, %2, %c0_2] : memref<1x1x48x128xf32, #tpu.memory_space<vmem>>, vector<1x1x32x128xf32>
    %4 = vector.shape_cast %3 : vector<1x1x32x128xf32> to vector<32x128xf32>
    %5 = arith.index_cast %arg0 : i32 to index
    %c1 = arith.constant 1 : index
    %6 = memref.load %arg2[%5, %c1] : memref<3x3xi32, #tpu.memory_space<smem>>
    %c0_3 = arith.constant 0 : index
    %c0_4 = arith.constant 0 : index
    %7 = arith.index_cast %6 : i32 to index
    %c0_5 = arith.constant 0 : index
    %8 = vector.load %arg3[%c0_3, %c0_4, %7, %c0_5] : memref<1x1x48x128xf32, #tpu.memory_space<vmem>>, vector<1x1x32x128xf32>
    %9 = vector.shape_cast %8 : vector<1x1x32x128xf32> to vector<32x128xf32>
    %10 = arith.index_cast %arg0 : i32 to index
    %c2 = arith.constant 2 : index
    %11 = memref.load %arg2[%10, %c2] : memref<3x3xi32, #tpu.memory_space<smem>>
    %c0_6 = arith.constant 0 : index
    %c0_7 = arith.constant 0 : index
    %12 = arith.index_cast %11 : i32 to index
    %c0_8 = arith.constant 0 : index
    %13 = vector.load %arg3[%c0_6, %c0_7, %12, %c0_8] : memref<1x1x48x128xf32, #tpu.memory_space<vmem>>, vector<1x1x32x128xf32>
    %14 = vector.shape_cast %13 : vector<1x1x32x128xf32> to vector<32x128xf32>
    %c0_9 = arith.constant 0 : index
    %c0_10 = arith.constant 0 : index
    %c8 = arith.constant 8 : index
    %c0_11 = arith.constant 0 : index
    %15 = vector.load %arg3[%c0_9, %c0_10, %c8, %c0_11] : memref<1x1x48x128xf32, #tpu.memory_space<vmem>>, vector<1x1x32x128xf32>
    %16 = vector.shape_cast %15 : vector<1x1x32x128xf32> to vector<32x128xf32>
    %17 = tpu.concatenate %4, %9, %14, %16 in 1 : vector<32x128xf32>, vector<32x128xf32>, vector<32x128xf32>, vector<32x128xf32> -> vector<32x512xf32>
    %c0_12 = arith.constant 0 : index
    %c0_13 = arith.constant 0 : index
    %c0_14 = arith.constant 0 : index
    %18 = vector.load %arg4[%c0_12, %c0_13, %c0_14] : memref<1x512x256xf32, #tpu.memory_space<vmem>>, vector<1x512x256xf32>
    %19 = vector.shape_cast %18 : vector<1x512x256xf32> to vector<512x256xf32>
    %cst = arith.constant dense<0.000000e+00> : vector<32x256xf32>
    %20 = tpu.matmul %17, %19, %cst {dimension_numbers = #tpu.dot_dimension_numbers<[1], [0], [0], [1], [0, 0, 1, 1], [], []>} : vector<32x512xf32>, vector<512x256xf32>, vector<32x256xf32> -> vector<32x256xf32>
    %c0_15 = arith.constant 0 : index
    %c0_16 = arith.constant 0 : index
    %c0_17 = arith.constant 0 : index
    %21 = vector.load %arg5[%c0_15, %c0_16, %c0_17] : memref<1x1x256xf32, #tpu.memory_space<vmem>>, vector<1x1x256xf32>
    %22 = vector.shape_cast %21 : vector<1x1x256xf32> to vector<1x256xf32>
    %23 = vector.broadcast %22 : vector<1x256xf32> to vector<32x256xf32>
    %24 = arith.addf %20, %23 : vector<32x256xf32>
    %25 = vector.extract_strided_slice %24 {offsets = [0, 0], sizes = [32, 128], strides = [1, 1]} : vector<32x256xf32> to vector<32x128xf32>
    %26 = vector.extract_strided_slice %24 {offsets = [0, 128], sizes = [32, 128], strides = [1, 1]} : vector<32x256xf32> to vector<32x128xf32>
    %27 = math.tanh %25 : vector<32x128xf32>
    %28 = arith.negf %25 : vector<32x128xf32>
    %29 = math.exp %28 : vector<32x128xf32>
    %cst_18 = arith.constant 1.000000e+00 : f32
    %30 = vector.broadcast %cst_18 : f32 to vector<32x128xf32>
    %31 = arith.addf %30, %29 : vector<32x128xf32>
    %32 = arith.divf %30, %31 : vector<32x128xf32>
    %33 = arith.mulf %27, %32 : vector<32x128xf32>
    %34 = arith.addf %33, %26 : vector<32x128xf32>
    %cst_19 = arith.constant 0.000000e+00 : f32
    %35 = vector.broadcast %cst_19 : f32 to vector<8x128xf32>
    %c0_20 = arith.constant 0 : index
    %c0_21 = arith.constant 0 : index
    %c0_22 = arith.constant 0 : index
    %c0_23 = arith.constant 0 : index
    %36 = vector.load %arg6[%c0_20, %c0_21, %c0_22, %c0_23] : memref<1x1x48x128xf32, #tpu.memory_space<vmem>>, vector<1x1x8x128xf32>
    %37 = vector.shape_cast %36 : vector<1x1x8x128xf32> to vector<8x128xf32>
    %38 = vector.shape_cast %35 : vector<8x128xf32> to vector<1x1x8x128xf32>
    tpu.vector_store %arg6[%c0_20, %c0_21, %c0_22, %c0_23], %38 {strides = array<i32>} : memref<1x1x48x128xf32, #tpu.memory_space<vmem>>, vector<1x1x8x128xf32>,
    %c0_24 = arith.constant 0 : index
    %c0_25 = arith.constant 0 : index
    %c40 = arith.constant 40 : index
    %c0_26 = arith.constant 0 : index
    %39 = vector.load %arg6[%c0_24, %c0_25, %c40, %c0_26] : memref<1x1x48x128xf32, #tpu.memory_space<vmem>>, vector<1x1x8x128xf32>
    %40 = vector.shape_cast %39 : vector<1x1x8x128xf32> to vector<8x128xf32>
    %41 = vector.shape_cast %35 : vector<8x128xf32> to vector<1x1x8x128xf32>
    tpu.vector_store %arg6[%c0_24, %c0_25, %c40, %c0_26], %41 {strides = array<i32>} : memref<1x1x48x128xf32, #tpu.memory_space<vmem>>, vector<1x1x8x128xf32>,
    %c0_27 = arith.constant 0 : index
    %c0_28 = arith.constant 0 : index
    %c8_29 = arith.constant 8 : index
    %c0_30 = arith.constant 0 : index
    %42 = vector.load %arg6[%c0_27, %c0_28, %c8_29, %c0_30] : memref<1x1x48x128xf32, #tpu.memory_space<vmem>>, vector<1x1x32x128xf32>
    %43 = vector.shape_cast %42 : vector<1x1x32x128xf32> to vector<32x128xf32>
    %44 = vector.shape_cast %34 : vector<32x128xf32> to vector<1x1x32x128xf32>
    tpu.vector_store %arg6[%c0_27, %c0_28, %c8_29, %c0_30], %44 {strides = array<i32>} : memref<1x1x48x128xf32, #tpu.memory_space<vmem>>, vector<1x1x32x128xf32>,
    return
  }
  func.func @transform_0(%arg0: i32, %arg1: i32, %arg2: memref<3x3xi32, #tpu.memory_space<smem>>) -> (i32, i32, i32, i32) {
    %c0_i32 = arith.constant 0 : i32
    %c0_i32_0 = arith.constant 0 : i32
    %c0_i32_1 = arith.constant 0 : i32
    %c0_i32_2 = arith.constant 0 : i32
    return %c0_i32, %arg1, %c0_i32_0, %c0_i32_1 : i32, i32, i32, i32
  }
  func.func @transform_1(%arg0: i32, %arg1: i32, %arg2: memref<3x3xi32, #tpu.memory_space<smem>>) -> (i32, i32, i32) {
    %c0_i32 = arith.constant 0 : i32
    %c0_i32_0 = arith.constant 0 : i32
    %c0_i32_1 = arith.constant 0 : i32
    return %arg0, %c0_i32, %c0_i32_0 : i32, i32, i32
  }
  func.func @transform_2(%arg0: i32, %arg1: i32, %arg2: memref<3x3xi32, #tpu.memory_space<smem>>) -> (i32, i32, i32) {
    %c0_i32 = arith.constant 0 : i32
    %c0_i32_0 = arith.constant 0 : i32
    %c0_i32_1 = arith.constant 0 : i32
    return %arg0, %c0_i32, %c0_i32_0 : i32, i32, i32
  }
  func.func @transform_3(%arg0: i32, %arg1: i32, %arg2: memref<3x3xi32, #tpu.memory_space<smem>>) -> (i32, i32, i32, i32) {
    %c0_i32 = arith.constant 0 : i32
    %c0_i32_0 = arith.constant 0 : i32
    %c0_i32_1 = arith.constant 0 : i32
    return %arg0, %arg1, %c0_i32, %c0_i32_0 : i32, i32, i32, i32
  }
}

module attributes {stable_mosaic.version = 11 : i64} {
  func.func @_init_conv_kernel(%arg0: i32, %arg1: memref<1x48x128xf32, #tpu.memory_space<vmem>>, %arg2: memref<384x128xf32, #tpu.memory_space<vmem>>, %arg3: memref<1x128xf32, #tpu.memory_space<vmem>>, %arg4: memref<1x1x48x128xf32, #tpu.memory_space<vmem>>) attributes {dimension_semantics = [#tpu.dimension_semantics<parallel>], iteration_bounds = array<i64: 2>, scalar_prefetch = 0 : i64, scratch_operands = 0 : i64, tpu.core_type = #tpu.core_type<tc>, window_params = [{transform_indices = @transform_0, window_bounds = array<i64: 1, 48, 128>}, {pipeline_mode = #tpu.pipeline_mode<synchronous>, transform_indices = @transform_1, window_bounds = array<i64: 384, 128>}, {pipeline_mode = #tpu.pipeline_mode<synchronous>, transform_indices = @transform_2, window_bounds = array<i64: 1, 128>}, {transform_indices = @transform_3, window_bounds = array<i64: 1, 1, 48, 128>}]} {
    %c0 = arith.constant 0 : index
    %c7 = arith.constant 7 : index
    %c0_0 = arith.constant 0 : index
    %0 = vector.load %arg1[%c0, %c7, %c0_0] : memref<1x48x128xf32, #tpu.memory_space<vmem>>, vector<1x32x128xf32>
    %1 = vector.shape_cast %0 : vector<1x32x128xf32> to vector<32x128xf32>
    %c0_1 = arith.constant 0 : index
    %c8 = arith.constant 8 : index
    %c0_2 = arith.constant 0 : index
    %2 = vector.load %arg1[%c0_1, %c8, %c0_2] : memref<1x48x128xf32, #tpu.memory_space<vmem>>, vector<1x32x128xf32>
    %3 = vector.shape_cast %2 : vector<1x32x128xf32> to vector<32x128xf32>
    %c0_3 = arith.constant 0 : index
    %c9 = arith.constant 9 : index
    %c0_4 = arith.constant 0 : index
    %4 = vector.load %arg1[%c0_3, %c9, %c0_4] : memref<1x48x128xf32, #tpu.memory_space<vmem>>, vector<1x32x128xf32>
    %5 = vector.shape_cast %4 : vector<1x32x128xf32> to vector<32x128xf32>
    %6 = tpu.concatenate %1, %3, %5 in 1 : vector<32x128xf32>, vector<32x128xf32>, vector<32x128xf32> -> vector<32x384xf32>
    %c0_5 = arith.constant 0 : index
    %c0_6 = arith.constant 0 : index
    %7 = vector.load %arg2[%c0_5, %c0_6] : memref<384x128xf32, #tpu.memory_space<vmem>>, vector<384x128xf32>
    %cst = arith.constant dense<0.000000e+00> : vector<32x128xf32>
    %8 = tpu.matmul %6, %7, %cst {dimension_numbers = #tpu.dot_dimension_numbers<[1], [0], [0], [1], [0, 0, 1, 1], [], []>} : vector<32x384xf32>, vector<384x128xf32>, vector<32x128xf32> -> vector<32x128xf32>
    %c0_7 = arith.constant 0 : index
    %c0_8 = arith.constant 0 : index
    %9 = vector.load %arg3[%c0_7, %c0_8] : memref<1x128xf32, #tpu.memory_space<vmem>>, vector<1x128xf32>
    %10 = vector.broadcast %9 : vector<1x128xf32> to vector<32x128xf32>
    %11 = arith.addf %8, %10 : vector<32x128xf32>
    %cst_9 = arith.constant 0.000000e+00 : f32
    %12 = vector.broadcast %cst_9 : f32 to vector<8x128xf32>
    %c0_10 = arith.constant 0 : index
    %c0_11 = arith.constant 0 : index
    %c0_12 = arith.constant 0 : index
    %c0_13 = arith.constant 0 : index
    %13 = vector.load %arg4[%c0_10, %c0_11, %c0_12, %c0_13] : memref<1x1x48x128xf32, #tpu.memory_space<vmem>>, vector<1x1x8x128xf32>
    %14 = vector.shape_cast %13 : vector<1x1x8x128xf32> to vector<8x128xf32>
    %15 = vector.shape_cast %12 : vector<8x128xf32> to vector<1x1x8x128xf32>
    tpu.vector_store %arg4[%c0_10, %c0_11, %c0_12, %c0_13], %15 {strides = array<i32>} : memref<1x1x48x128xf32, #tpu.memory_space<vmem>>, vector<1x1x8x128xf32>,
    %c0_14 = arith.constant 0 : index
    %c0_15 = arith.constant 0 : index
    %c40 = arith.constant 40 : index
    %c0_16 = arith.constant 0 : index
    %16 = vector.load %arg4[%c0_14, %c0_15, %c40, %c0_16] : memref<1x1x48x128xf32, #tpu.memory_space<vmem>>, vector<1x1x8x128xf32>
    %17 = vector.shape_cast %16 : vector<1x1x8x128xf32> to vector<8x128xf32>
    %18 = vector.shape_cast %12 : vector<8x128xf32> to vector<1x1x8x128xf32>
    tpu.vector_store %arg4[%c0_14, %c0_15, %c40, %c0_16], %18 {strides = array<i32>} : memref<1x1x48x128xf32, #tpu.memory_space<vmem>>, vector<1x1x8x128xf32>,
    %c0_17 = arith.constant 0 : index
    %c0_18 = arith.constant 0 : index
    %c8_19 = arith.constant 8 : index
    %c0_20 = arith.constant 0 : index
    %19 = vector.load %arg4[%c0_17, %c0_18, %c8_19, %c0_20] : memref<1x1x48x128xf32, #tpu.memory_space<vmem>>, vector<1x1x32x128xf32>
    %20 = vector.shape_cast %19 : vector<1x1x32x128xf32> to vector<32x128xf32>
    %21 = vector.shape_cast %11 : vector<32x128xf32> to vector<1x1x32x128xf32>
    tpu.vector_store %arg4[%c0_17, %c0_18, %c8_19, %c0_20], %21 {strides = array<i32>} : memref<1x1x48x128xf32, #tpu.memory_space<vmem>>, vector<1x1x32x128xf32>,
    return
  }
  func.func @transform_0(%arg0: i32) -> (i32, i32, i32) {
    %c0_i32 = arith.constant 0 : i32
    %c0_i32_0 = arith.constant 0 : i32
    %c0_i32_1 = arith.constant 0 : i32
    return %arg0, %c0_i32, %c0_i32_0 : i32, i32, i32
  }
  func.func @transform_1(%arg0: i32) -> (i32, i32) {
    %c0_i32 = arith.constant 0 : i32
    %c0_i32_0 = arith.constant 0 : i32
    %c0_i32_1 = arith.constant 0 : i32
    return %c0_i32, %c0_i32_0 : i32, i32
  }
  func.func @transform_2(%arg0: i32) -> (i32, i32) {
    %c0_i32 = arith.constant 0 : i32
    %c0_i32_0 = arith.constant 0 : i32
    %c0_i32_1 = arith.constant 0 : i32
    return %c0_i32, %c0_i32_0 : i32, i32
  }
  func.func @transform_3(%arg0: i32) -> (i32, i32, i32, i32) {
    %c0_i32 = arith.constant 0 : i32
    %c0_i32_0 = arith.constant 0 : i32
    %c0_i32_1 = arith.constant 0 : i32
    %c0_i32_2 = arith.constant 0 : i32
    return %c0_i32, %arg0, %c0_i32_0, %c0_i32_1 : i32, i32, i32, i32
  }
}

module attributes {stable_mosaic.version = 11 : i64} {
  func.func @_last_stack_kernel(%arg0: i32, %arg1: i32, %arg2: memref<3x3xi32, #tpu.memory_space<smem>>, %arg3: memref<1x1x48x128xf32, #tpu.memory_space<vmem>>, %arg4: memref<1x512x256xf32, #tpu.memory_space<vmem>>, %arg5: memref<1x1x256xf32, #tpu.memory_space<vmem>>, %arg6: memref<1x128x128xf32, #tpu.memory_space<vmem>>, %arg7: memref<1x1x128xf32, #tpu.memory_space<vmem>>, %arg8: memref<128x128xf32, #tpu.memory_space<vmem>>, %arg9: memref<1x128xf32, #tpu.memory_space<vmem>>, %arg10: memref<1x32x128xf32, #tpu.memory_space<vmem>>, %arg11: memref<32x128xf32, #tpu.memory_space<vmem>>) attributes {dimension_semantics = [#tpu.dimension_semantics<parallel>, #tpu.dimension_semantics<arbitrary>], iteration_bounds = array<i64: 2, 3>, scalar_prefetch = 1 : i64, scratch_operands = 1 : i64, tpu.core_type = #tpu.core_type<tc>, window_params = [{transform_indices = @transform_0, window_bounds = array<i64: 1, 1, 48, 128>}, {transform_indices = @transform_1, window_bounds = array<i64: 1, 512, 256>}, {transform_indices = @transform_2, window_bounds = array<i64: 1, 1, 256>}, {transform_indices = @transform_3, window_bounds = array<i64: 1, 128, 128>}, {transform_indices = @transform_4, window_bounds = array<i64: 1, 1, 128>}, {pipeline_mode = #tpu.pipeline_mode<synchronous>, transform_indices = @transform_5, window_bounds = array<i64: 128, 128>}, {pipeline_mode = #tpu.pipeline_mode<synchronous>, transform_indices = @transform_6, window_bounds = array<i64: 1, 128>}, {transform_indices = @transform_7, window_bounds = array<i64: 1, 32, 128>}]} {
    %c0_i32 = arith.constant 0 : i32
    %0 = arith.cmpi eq, %arg1, %c0_i32 : i32
    %1 = arith.extui %0 : i1 to i32
    %c0_i32_0 = arith.constant 0 : i32
    %2 = arith.cmpi ne, %1, %c0_i32_0 : i32
    scf.if %2 {
      %cst_32 = arith.constant 0.000000e+00 : f32
      %51 = vector.broadcast %cst_32 : f32 to vector<32x128xf32>
      %c0_33 = arith.constant 0 : index
      %c0_34 = arith.constant 0 : index
      %52 = vector.load %arg11[%c0_33, %c0_34] : memref<32x128xf32, #tpu.memory_space<vmem>>, vector<32x128xf32>
      tpu.vector_store %arg11[%c0_33, %c0_34], %51 {strides = array<i32>} : memref<32x128xf32, #tpu.memory_space<vmem>>, vector<32x128xf32>,
    } else {
    }
    %3 = arith.index_cast %arg1 : i32 to index
    %c0 = arith.constant 0 : index
    %4 = memref.load %arg2[%3, %c0] : memref<3x3xi32, #tpu.memory_space<smem>>
    %c0_1 = arith.constant 0 : index
    %c0_2 = arith.constant 0 : index
    %5 = arith.index_cast %4 : i32 to index
    %c0_3 = arith.constant 0 : index
    %6 = vector.load %arg3[%c0_1, %c0_2, %5, %c0_3] : memref<1x1x48x128xf32, #tpu.memory_space<vmem>>, vector<1x1x32x128xf32>
    %7 = vector.shape_cast %6 : vector<1x1x32x128xf32> to vector<32x128xf32>
    %8 = arith.index_cast %arg1 : i32 to index
    %c1 = arith.constant 1 : index
    %9 = memref.load %arg2[%8, %c1] : memref<3x3xi32, #tpu.memory_space<smem>>
    %c0_4 = arith.constant 0 : index
    %c0_5 = arith.constant 0 : index
    %10 = arith.index_cast %9 : i32 to index
    %c0_6 = arith.constant 0 : index
    %11 = vector.load %arg3[%c0_4, %c0_5, %10, %c0_6] : memref<1x1x48x128xf32, #tpu.memory_space<vmem>>, vector<1x1x32x128xf32>
    %12 = vector.shape_cast %11 : vector<1x1x32x128xf32> to vector<32x128xf32>
    %13 = arith.index_cast %arg1 : i32 to index
    %c2 = arith.constant 2 : index
    %14 = memref.load %arg2[%13, %c2] : memref<3x3xi32, #tpu.memory_space<smem>>
    %c0_7 = arith.constant 0 : index
    %c0_8 = arith.constant 0 : index
    %15 = arith.index_cast %14 : i32 to index
    %c0_9 = arith.constant 0 : index
    %16 = vector.load %arg3[%c0_7, %c0_8, %15, %c0_9] : memref<1x1x48x128xf32, #tpu.memory_space<vmem>>, vector<1x1x32x128xf32>
    %17 = vector.shape_cast %16 : vector<1x1x32x128xf32> to vector<32x128xf32>
    %c0_10 = arith.constant 0 : index
    %c0_11 = arith.constant 0 : index
    %c8 = arith.constant 8 : index
    %c0_12 = arith.constant 0 : index
    %18 = vector.load %arg3[%c0_10, %c0_11, %c8, %c0_12] : memref<1x1x48x128xf32, #tpu.memory_space<vmem>>, vector<1x1x32x128xf32>
    %19 = vector.shape_cast %18 : vector<1x1x32x128xf32> to vector<32x128xf32>
    %20 = tpu.concatenate %7, %12, %17, %19 in 1 : vector<32x128xf32>, vector<32x128xf32>, vector<32x128xf32>, vector<32x128xf32> -> vector<32x512xf32>
    %c0_13 = arith.constant 0 : index
    %c0_14 = arith.constant 0 : index
    %c0_15 = arith.constant 0 : index
    %21 = vector.load %arg4[%c0_13, %c0_14, %c0_15] : memref<1x512x256xf32, #tpu.memory_space<vmem>>, vector<1x512x256xf32>
    %22 = vector.shape_cast %21 : vector<1x512x256xf32> to vector<512x256xf32>
    %cst = arith.constant dense<0.000000e+00> : vector<32x256xf32>
    %23 = tpu.matmul %20, %22, %cst {dimension_numbers = #tpu.dot_dimension_numbers<[1], [0], [0], [1], [0, 0, 1, 1], [], []>} : vector<32x512xf32>, vector<512x256xf32>, vector<32x256xf32> -> vector<32x256xf32>
    %c0_16 = arith.constant 0 : index
    %c0_17 = arith.constant 0 : index
    %c0_18 = arith.constant 0 : index
    %24 = vector.load %arg5[%c0_16, %c0_17, %c0_18] : memref<1x1x256xf32, #tpu.memory_space<vmem>>, vector<1x1x256xf32>
    %25 = vector.shape_cast %24 : vector<1x1x256xf32> to vector<1x256xf32>
    %26 = vector.broadcast %25 : vector<1x256xf32> to vector<32x256xf32>
    %27 = arith.addf %23, %26 : vector<32x256xf32>
    %28 = vector.extract_strided_slice %27 {offsets = [0, 0], sizes = [32, 128], strides = [1, 1]} : vector<32x256xf32> to vector<32x128xf32>
    %29 = vector.extract_strided_slice %27 {offsets = [0, 128], sizes = [32, 128], strides = [1, 1]} : vector<32x256xf32> to vector<32x128xf32>
    %30 = math.tanh %28 : vector<32x128xf32>
    %31 = arith.negf %28 : vector<32x128xf32>
    %32 = math.exp %31 : vector<32x128xf32>
    %cst_19 = arith.constant 1.000000e+00 : f32
    %33 = vector.broadcast %cst_19 : f32 to vector<32x128xf32>
    %34 = arith.addf %33, %32 : vector<32x128xf32>
    %35 = arith.divf %33, %34 : vector<32x128xf32>
    %36 = arith.mulf %30, %35 : vector<32x128xf32>
    %37 = arith.addf %36, %29 : vector<32x128xf32>
    %c0_20 = arith.constant 0 : index
    %c0_21 = arith.constant 0 : index
    %c0_22 = arith.constant 0 : index
    %38 = vector.load %arg6[%c0_20, %c0_21, %c0_22] : memref<1x128x128xf32, #tpu.memory_space<vmem>>, vector<1x128x128xf32>
    %39 = vector.shape_cast %38 : vector<1x128x128xf32> to vector<128x128xf32>
    %cst_23 = arith.constant dense<0.000000e+00> : vector<32x128xf32>
    %40 = tpu.matmul %37, %39, %cst_23 {dimension_numbers = #tpu.dot_dimension_numbers<[1], [0], [0], [1], [0, 0, 1, 1], [], []>} : vector<32x128xf32>, vector<128x128xf32>, vector<32x128xf32> -> vector<32x128xf32>
    %c0_24 = arith.constant 0 : index
    %c0_25 = arith.constant 0 : index
    %c0_26 = arith.constant 0 : index
    %41 = vector.load %arg7[%c0_24, %c0_25, %c0_26] : memref<1x1x128xf32, #tpu.memory_space<vmem>>, vector<1x1x128xf32>
    %42 = vector.shape_cast %41 : vector<1x1x128xf32> to vector<1x128xf32>
    %43 = vector.broadcast %42 : vector<1x128xf32> to vector<32x128xf32>
    %44 = arith.addf %40, %43 : vector<32x128xf32>
    %c0_27 = arith.constant 0 : index
    %c0_28 = arith.constant 0 : index
    %45 = vector.load %arg11[%c0_27, %c0_28] : memref<32x128xf32, #tpu.memory_space<vmem>>, vector<32x128xf32>
    %46 = arith.addf %45, %44 : vector<32x128xf32>
    %c0_29 = arith.constant 0 : index
    %c0_30 = arith.constant 0 : index
    %47 = vector.load %arg11[%c0_29, %c0_30] : memref<32x128xf32, #tpu.memory_space<vmem>>, vector<32x128xf32>
    tpu.vector_store %arg11[%c0_29, %c0_30], %46 {strides = array<i32>} : memref<32x128xf32, #tpu.memory_space<vmem>>, vector<32x128xf32>,
    %c2_i32 = arith.constant 2 : i32
    %48 = arith.cmpi eq, %arg1, %c2_i32 : i32
    %49 = arith.extui %48 : i1 to i32
    %c0_i32_31 = arith.constant 0 : i32
    %50 = arith.cmpi ne, %49, %c0_i32_31 : i32
    scf.if %50 {
      %c0_32 = arith.constant 0 : index
      %c0_33 = arith.constant 0 : index
      %51 = vector.load %arg11[%c0_32, %c0_33] : memref<32x128xf32, #tpu.memory_space<vmem>>, vector<32x128xf32>
      %c0_34 = arith.constant 0 : index
      %c0_35 = arith.constant 0 : index
      %52 = vector.load %arg8[%c0_34, %c0_35] : memref<128x128xf32, #tpu.memory_space<vmem>>, vector<128x128xf32>
      %cst_36 = arith.constant dense<0.000000e+00> : vector<32x128xf32>
      %53 = tpu.matmul %51, %52, %cst_36 {dimension_numbers = #tpu.dot_dimension_numbers<[1], [0], [0], [1], [0, 0, 1, 1], [], []>} : vector<32x128xf32>, vector<128x128xf32>, vector<32x128xf32> -> vector<32x128xf32>
      %c0_37 = arith.constant 0 : index
      %c0_38 = arith.constant 0 : index
      %54 = vector.load %arg9[%c0_37, %c0_38] : memref<1x128xf32, #tpu.memory_space<vmem>>, vector<1x128xf32>
      %55 = vector.broadcast %54 : vector<1x128xf32> to vector<32x128xf32>
      %56 = arith.addf %53, %55 : vector<32x128xf32>
      %c0_39 = arith.constant 0 : index
      %c0_40 = arith.constant 0 : index
      %c0_41 = arith.constant 0 : index
      %57 = vector.load %arg10[%c0_39, %c0_40, %c0_41] : memref<1x32x128xf32, #tpu.memory_space<vmem>>, vector<1x32x128xf32>
      %58 = vector.shape_cast %57 : vector<1x32x128xf32> to vector<32x128xf32>
      %59 = vector.shape_cast %56 : vector<32x128xf32> to vector<1x32x128xf32>
      tpu.vector_store %arg10[%c0_39, %c0_40, %c0_41], %59 {strides = array<i32>} : memref<1x32x128xf32, #tpu.memory_space<vmem>>, vector<1x32x128xf32>,
    } else {
    }
    return
  }
  func.func @transform_0(%arg0: i32, %arg1: i32, %arg2: memref<3x3xi32, #tpu.memory_space<smem>>) -> (i32, i32, i32, i32) {
    %c0_i32 = arith.constant 0 : i32
    %c0_i32_0 = arith.constant 0 : i32
    %c0_i32_1 = arith.constant 0 : i32
    return %arg1, %arg0, %c0_i32, %c0_i32_0 : i32, i32, i32, i32
  }
  func.func @transform_1(%arg0: i32, %arg1: i32, %arg2: memref<3x3xi32, #tpu.memory_space<smem>>) -> (i32, i32, i32) {
    %c0_i32 = arith.constant 0 : i32
    %c0_i32_0 = arith.constant 0 : i32
    %c0_i32_1 = arith.constant 0 : i32
    return %arg1, %c0_i32, %c0_i32_0 : i32, i32, i32
  }
  func.func @transform_2(%arg0: i32, %arg1: i32, %arg2: memref<3x3xi32, #tpu.memory_space<smem>>) -> (i32, i32, i32) {
    %c0_i32 = arith.constant 0 : i32
    %c0_i32_0 = arith.constant 0 : i32
    %c0_i32_1 = arith.constant 0 : i32
    return %arg1, %c0_i32, %c0_i32_0 : i32, i32, i32
  }
  func.func @transform_3(%arg0: i32, %arg1: i32, %arg2: memref<3x3xi32, #tpu.memory_space<smem>>) -> (i32, i32, i32) {
    %c0_i32 = arith.constant 0 : i32
    %c0_i32_0 = arith.constant 0 : i32
    %c0_i32_1 = arith.constant 0 : i32
    return %arg1, %c0_i32, %c0_i32_0 : i32, i32, i32
  }
  func.func @transform_4(%arg0: i32, %arg1: i32, %arg2: memref<3x3xi32, #tpu.memory_space<smem>>) -> (i32, i32, i32) {
    %c0_i32 = arith.constant 0 : i32
    %c0_i32_0 = arith.constant 0 : i32
    %c0_i32_1 = arith.constant 0 : i32
    return %arg1, %c0_i32, %c0_i32_0 : i32, i32, i32
  }
  func.func @transform_5(%arg0: i32, %arg1: i32, %arg2: memref<3x3xi32, #tpu.memory_space<smem>>) -> (i32, i32) {
    %c0_i32 = arith.constant 0 : i32
    %c0_i32_0 = arith.constant 0 : i32
    %c0_i32_1 = arith.constant 0 : i32
    return %c0_i32, %c0_i32_0 : i32, i32
  }
  func.func @transform_6(%arg0: i32, %arg1: i32, %arg2: memref<3x3xi32, #tpu.memory_space<smem>>) -> (i32, i32) {
    %c0_i32 = arith.constant 0 : i32
    %c0_i32_0 = arith.constant 0 : i32
    %c0_i32_1 = arith.constant 0 : i32
    return %c0_i32, %c0_i32_0 : i32, i32
  }
  func.func @transform_7(%arg0: i32, %arg1: i32, %arg2: memref<3x3xi32, #tpu.memory_space<smem>>) -> (i32, i32, i32) {
    %c0_i32 = arith.constant 0 : i32
    %c0_i32_0 = arith.constant 0 : i32
    %c0_i32_1 = arith.constant 0 : i32
    return %arg0, %c0_i32, %c0_i32_0 : i32, i32, i32
  }
}

</mosaic_0001>

<llo_original>
// kernel: wavenet_forward.3
$region0: #{wavenet_forward.3}
  #allocation0 [shape = 'u32[]', space=smem, size = 0x4, offset = 0x4, fixed_abs, tag = 'smem constant byte address 0x4 - core index']
  #allocation1 [shape = 'u32[144,128]{1,0:T(1,128)}', space=vmem, size = 0x12000, scoped, tag = 'internal scratch']
  %s0 = inlined_call_operand.vmem [shape: f32[2,48,128], index: 0, kind: input, shape index: {}]
  %s1 = inlined_call_operand.vmem [shape: f32[384,128], index: 1, kind: input, shape index: {}]
  %s2 = inlined_call_operand.vmem [shape: f32[1,128], index: 2, kind: input, shape index: {}]
  %s3 = inlined_call_operand.vmem [shape: f32[1,2,48,128], index: 3, kind: output, shape index: {}]
  %s4 = sld [smem:[#allocation0]]
  $region45: #{wavenet_forward.3} parent=0
    _
  %s6 = ssub.s32 1, %s4
  %s7 = scalar_select 0, %s6, %s4
  loop: start=0, step=1, limit=4
  $region2: #{wavenet_forward.3} parent=0 // loop_pre_header
    _
  $region3: #{wavenet_forward.3} parent=0 // loop_header
    %s9 = sphi 0, %s13
    %p10 = scmp.ge.s32.totalorder %s9, 4
    %s19 = sphi 0, %s21
    %s22 = sphi 0, %s19
    %s23 = sphi 0, %s22
    %s39 = sphi 0, %s23
    %s43 = sphi 0, %s43
    %s45 = sphi 0, %s43
    %s46 = sphi 0, %s45
    %s60 = sphi 0, %s46
    %s64 = sphi 0, %s64
    %s66 = sphi 0, %s64
    %s67 = sphi 0, %s66
    %s81 = sphi 0, %s67
    %s87 = sphi 0, %s89
    %s90 = sphi 0, %s87
    %s91 = sphi 0, %s90
    %s107 = sphi 0, %s91
  $region4: #{wavenet_forward.3} parent=0 // loop_header_branch
    %12 = sbr.rel (%p10) target = $region8
  $region5: #{wavenet_forward.3} parent=0 // loop_body
    %s14 = ssub.s32 %s9, 1
    %s15 = ssub.s32 %s9, 2
    %s16 = sadd.s32 %s9, 1
    %s17 = ssub.s32 %s9, %s16
    %p18 = scmp.eq.s32.totalorder %s17, 0
    %s20 = sadd.s32 %s19, 1
    %s21 = scalar_select %p18, %s19, %s20
    %p24 = pneg %p18
    %p25 = scmp.eq.s32.totalorder %s9, 1
    %p26 = por %p24, %p25
    %p27 = scmp.ne.s32.totalorder %s19, %s22
    %p28 = scmp.eq.s32.totalorder %s9, 0
    %p29 = por %p27, %p28
    %p30 = scmp.ne.s32.totalorder %s19, %s22
    %p31 = scmp.eq.s32.totalorder %s14, 1
    %p32 = por %p30, %p31
    %p33 = scmp.ne.s32.totalorder %s22, %s23
    %p34 = scmp.eq.s32.totalorder %s14, 0
    %p35 = por %p33, %p34
    %p36 = scmp.ne.s32.totalorder %s22, %s23
    %p37 = scmp.eq.s32.totalorder %s15, 1
    %p38 = por %p36, %p37
    %p40 = scmp.ne.s32.totalorder %s23, %s39
    %p41 = scmp.eq.s32.totalorder %s15, 0
    %p42 = por %p40, %p41
    %s44 = sadd.s32 %s43, 1
    %p47 = scmp.eq.s32.totalorder %s9, 1
    %p48 = scmp.ne.s32.totalorder %s43, %s45
    %p49 = scmp.eq.s32.totalorder %s9, 0
    %p50 = por %p48, %p49
    %p51 = scmp.ne.s32.totalorder %s43, %s45
    %p52 = scmp.eq.s32.totalorder %s14, 1
    %p53 = por %p51, %p52
    %p54 = scmp.ne.s32.totalorder %s45, %s46
    %p55 = scmp.eq.s32.totalorder %s14, 0
    %p56 = por %p54, %p55
    %p57 = scmp.ne.s32.totalorder %s45, %s46
    %p58 = scmp.eq.s32.totalorder %s15, 1
    %p59 = por %p57, %p58
    %p61 = scmp.ne.s32.totalorder %s46, %s60
    %p62 = scmp.eq.s32.totalorder %s15, 0
    %p63 = por %p61, %p62
    %s65 = sadd.s32 %s64, 1
    %p68 = scmp.eq.s32.totalorder %s9, 1
    %p69 = scmp.ne.s32.totalorder %s64, %s66
    %p70 = scmp.eq.s32.totalorder %s9, 0
    %p71 = por %p69, %p70
    %p72 = scmp.ne.s32.totalorder %s64, %s66
    %p73 = scmp.eq.s32.totalorder %s14, 1
    %p74 = por %p72, %p73
    %p75 = scmp.ne.s32.totalorder %s66, %s67
    %p76 = scmp.eq.s32.totalorder %s14, 0
    %p77 = por %p75, %p76
    %p78 = scmp.ne.s32.totalorder %s66, %s67
    %p79 = scmp.eq.s32.totalorder %s15, 1
    %p80 = por %p78, %p79
    %p82 = scmp.ne.s32.totalorder %s67, %s81
    %p83 = scmp.eq.s32.totalorder %s15, 0
    %p84 = por %p82, %p83
    %s85 = ssub.s32 %s9, %s16
    %p86 = scmp.eq.s32.totalorder %s85, 0
    %s88 = sadd.s32 %s87, 1
    %s89 = scalar_select %p86, %s87, %s88
    %p92 = pneg %p86
    %p93 = scmp.eq.s32.totalorder %s9, 1
    %p94 = por %p92, %p93
    %p95 = scmp.ne.s32.totalorder %s87, %s90
    %p96 = scmp.eq.s32.totalorder %s9, 0
    %p97 = por %p95, %p96
    %p98 = scmp.ne.s32.totalorder %s87, %s90
    %p99 = scmp.eq.s32.totalorder %s14, 1
    %p100 = por %p98, %p99
    %p101 = scmp.ne.s32.totalorder %s90, %s91
    %p102 = scmp.eq.s32.totalorder %s14, 0
    %p103 = por %p101, %p102
    %p104 = scmp.ne.s32.totalorder %s90, %s91
    %p105 = scmp.eq.s32.totalorder %s15, 1
    %p106 = por %p104, %p105
    %p108 = scmp.ne.s32.totalorder %s91, %s107
    %p109 = scmp.eq.s32.totalorder %s15, 0
    %p110 = por %p108, %p109
    %p111 = scmp.le.s32.totalorder 1, %s9
    %p112 = scmp.lt.s32.totalorder %s9, 3
    %p113 = pnand %p111, %p112
    %p114 = pneg %p113
    // Predicated region
    $region9: #{wavenet_forward.3} parent=5 // pred_check
      _
    $region10: #{wavenet_forward.3} parent=5 // pred_check_branch
      %116 = sbr.rel (%p113) target = $region12
    $region11: #{wavenet_forward.3} parent=5 // pred_region
      %s117 = ssub.s32 %s9, 1
      // Predicated region
      $region13: #{wavenet_forward.3} parent=11 // pred_check
        %p118 = pneg %p56
      $region14: #{wavenet_forward.3} parent=11 // pred_check_branch
        %120 = sbr.rel (%p118) target = $region16
      $region15: #{wavenet_forward.3} parent=11 // pred_region
        _
      $region16: #{wavenet_forward.3} parent=11 // pred_fallthru
        _
      // Predicated region
      $region17: #{wavenet_forward.3} parent=11 // pred_check
        %p121 = pneg %p77
      $region18: #{wavenet_forward.3} parent=11 // pred_check_branch
        %123 = sbr.rel (%p121) target = $region20
      $region19: #{wavenet_forward.3} parent=11 // pred_region
        _
      $region20: #{wavenet_forward.3} parent=11 // pred_fallthru
        _
    $region12: #{wavenet_forward.3} parent=5 // pred_fallthru
      _
    %p124 = scmp.lt.s32.totalorder %s9, 2
    // Predicated region
    $region21: #{wavenet_forward.3} parent=5 // pred_check
      %p125 = pneg %p124
    $region22: #{wavenet_forward.3} parent=5 // pred_check_branch
      %127 = sbr.rel (%p125) target = $region24
    $region23: #{wavenet_forward.3} parent=5 // pred_region
      // Predicated region
      $region25: #{wavenet_forward.3} parent=23 // pred_check
        %p128 = pneg %p29
      $region26: #{wavenet_forward.3} parent=23 // pred_check_branch
        %130 = sbr.rel (%p128) target = $region28
      $region27: #{wavenet_forward.3} parent=23 // pred_region
        %p131 = scmp.lt.s32.totalorder %s9, 1
        %s132 = scalar_select %p131, %s9, 1
        %s133 = smul.addr %s132, 6
        %s134 = smul.addr %s133, 8
        %s135 = scalar_lea.vmem %s0, %s134
      $region28: #{wavenet_forward.3} parent=23 // pred_fallthru
        _
    $region24: #{wavenet_forward.3} parent=5 // pred_fallthru
      _
    %p136 = scmp.le.s32.totalorder 1, %s9
    %p137 = scmp.lt.s32.totalorder %s9, 3
    %p138 = pnand %p136, %p137
    %p139 = pneg %p138
    // Predicated region
    $region29: #{wavenet_forward.3} parent=5 // pred_check
      _
    $region30: #{wavenet_forward.3} parent=5 // pred_check_branch
      %141 = sbr.rel (%p138) target = $region32
    $region31: #{wavenet_forward.3} parent=5 // pred_region
      %s142 = ssub.s32 %s9, 1
      %p143 = scmp.lt.s32.totalorder %s14, 1
      %s144 = scalar_select %p143, %s14, 1
      %s145 = smul.addr %s144, 6
      %s146 = smul.addr %s145, 8
      %s147 = scalar_lea.vmem %s0, %s146
      %p148 = pneg %p35
      %p149 = pneg %p32
      %p150 = pneg %p56
      %p151 = pneg %p53
      %p152 = pneg %p77
      %p153 = pneg %p74
      %p154 = pneg %p103
      %p155 = pneg %p100
      %p156 = scmp.lt.s32.totalorder %s14, 1
      %s157 = scalar_select %p156, %s14, 1
      %s158 = smul.addr %s157, 6
      %s159 = smul.addr %s158, 8
      %s160 = scalar_lea.vmem %s3, %s159
      %p161 = scmp.lt.s32.totalorder %s14, 1
      %s162 = scalar_select %p161, %s14, 1
      %s163 = smul.addr %s162, 6
      %s164 = smul.addr %s163, 8
      %s165 = scalar_lea.vmem %s0, %s164
      %p166 = scmp.lt.s32.totalorder %s14, 1
      %s167 = scalar_select %p166, %s14, 1
      %s168 = smul.addr %s167, 6
      %s169 = smul.addr %s168, 8
      %s170 = scalar_lea.vmem %s3, %s169
      %v171 = vld [vmem:[%s165 + $0x7] sm:$0xff]
      %v172 = vld [vmem:[%s165 + $0xf] sm:$0xff]
      %v173 = vld [vmem:[%s165 + $0x17] sm:$0xff]
      %v174 = vld [vmem:[%s165 + $0x1f] sm:$0xff]
      %v175 = vld [vmem:[%s165 + $0x8] sm:$0xff]
      %v176 = vld [vmem:[%s165 + $0x10] sm:$0xff]
      %v177 = vld [vmem:[%s165 + $0x18] sm:$0xff]
      %v178 = vld [vmem:[%s165 + $0x20] sm:$0xff]
      %v179 = vld [vmem:[%s165 + $0x9] sm:$0xff]
      %v180 = vld [vmem:[%s165 + $0x11] sm:$0xff]
      %v181 = vld [vmem:[%s165 + $0x19] sm:$0xff]
      %v182 = vld [vmem:[%s165 + $0x21] sm:$0xff]
      %v183 = vld [vmem:[%s1] sm:$0xff]
      %v184 = vld [vmem:[%s1 + $0x8] sm:$0xff]
      %v185 = vld [vmem:[%s1 + $0x10] sm:$0xff]
      %v186 = vld [vmem:[%s1 + $0x18] sm:$0xff]
      %v187 = vld [vmem:[%s1 + $0x20] sm:$0xff]
      %v188 = vld [vmem:[%s1 + $0x28] sm:$0xff]
      %v189 = vld [vmem:[%s1 + $0x30] sm:$0xff]
      %v190 = vld [vmem:[%s1 + $0x38] sm:$0xff]
      %v191 = vld [vmem:[%s1 + $0x40] sm:$0xff]
      %v192 = vld [vmem:[%s1 + $0x48] sm:$0xff]
      %v193 = vld [vmem:[%s1 + $0x50] sm:$0xff]
      %v194 = vld [vmem:[%s1 + $0x58] sm:$0xff]
      %v195 = vld [vmem:[%s1 + $0x60] sm:$0xff]
      %v196 = vld [vmem:[%s1 + $0x68] sm:$0xff]
      %v197 = vld [vmem:[%s1 + $0x70] sm:$0xff]
      %v198 = vld [vmem:[%s1 + $0x78] sm:$0xff]
      %v199 = vld [vmem:[%s1 + $0x80] sm:$0xff]
      %v200 = vld [vmem:[%s1 + $0x88] sm:$0xff]
      %v201 = vld [vmem:[%s1 + $0x90] sm:$0xff]
      %v202 = vld [vmem:[%s1 + $0x98] sm:$0xff]
      %v203 = vld [vmem:[%s1 + $0xa0] sm:$0xff]
      %v204 = vld [vmem:[%s1 + $0xa8] sm:$0xff]
      %v205 = vld [vmem:[%s1 + $0xb0] sm:$0xff]
      %v206 = vld [vmem:[%s1 + $0xb8] sm:$0xff]
      %v207 = vld [vmem:[%s1 + $0xc0] sm:$0xff]
      %v208 = vld [vmem:[%s1 + $0xc8] sm:$0xff]
      %v209 = vld [vmem:[%s1 + $0xd0] sm:$0xff]
      %v210 = vld [vmem:[%s1 + $0xd8] sm:$0xff]
      %v211 = vld [vmem:[%s1 + $0xe0] sm:$0xff]
      %v212 = vld [vmem:[%s1 + $0xe8] sm:$0xff]
      %v213 = vld [vmem:[%s1 + $0xf0] sm:$0xff]
      %v214 = vld [vmem:[%s1 + $0xf8] sm:$0xff]
      %v215 = vld [vmem:[%s1 + $0x100] sm:$0xff]
      %v216 = vld [vmem:[%s1 + $0x108] sm:$0xff]
      %v217 = vld [vmem:[%s1 + $0x110] sm:$0xff]
      %v218 = vld [vmem:[%s1 + $0x118] sm:$0xff]
      %v219 = vld [vmem:[%s1 + $0x120] sm:$0xff]
      %v220 = vld [vmem:[%s1 + $0x128] sm:$0xff]
      %v221 = vld [vmem:[%s1 + $0x130] sm:$0xff]
      %v222 = vld [vmem:[%s1 + $0x138] sm:$0xff]
      %v223 = vld [vmem:[%s1 + $0x140] sm:$0xff]
      %v224 = vld [vmem:[%s1 + $0x148] sm:$0xff]
      %v225 = vld [vmem:[%s1 + $0x150] sm:$0xff]
      %v226 = vld [vmem:[%s1 + $0x158] sm:$0xff]
      %v227 = vld [vmem:[%s1 + $0x160] sm:$0xff]
      %v228 = vld [vmem:[%s1 + $0x168] sm:$0xff]
      %v229 = vld [vmem:[%s1 + $0x170] sm:$0xff]
      %v230 = vld [vmem:[%s1 + $0x178] sm:$0xff]
      %v231 = vld [vmem:[%s2] sm:$0x1]
      %v233 = vlaneseq
      %v234 = vshrl.u32 %v233, 7
      %v235 = vsub.s32 0, %v234
      %v236 = vrot.slane %v231, %v235
      %238 = vmatprep.subr.mxu0 0.0
      %239 = vmatpush1.msra.mxu0 %v183
      %240 = vmatprep.subr.mxu0 0.0
      %241 = vmatpush1.msra.mxu0 %v184
      %242 = vmatprep.subr.mxu0 0.0
      %243 = vmatpush1.msra.mxu0 %v185
      %244 = vmatprep.subr.mxu0 0.0
      %245 = vmatpush1.msra.mxu0 %v186
      %246 = vmatprep.subr.mxu0 0.0
      %247 = vmatpush1.msra.mxu0 %v187
      %248 = vmatprep.subr.mxu0 0.0
      %249 = vmatpush1.msra.mxu0 %v188
      %250 = vmatprep.subr.mxu0 0.0
      %251 = vmatpush1.msra.mxu0 %v189
      %252 = vmatprep.subr.mxu0 0.0
      %253 = vmatpush1.msra.mxu0 %v190
      %254 = vmatprep.subr.mxu0 0.0
      %255 = vmatpush1.msra.mxu0 %v191
      %256 = vmatprep.subr.mxu0 0.0
      %257 = vmatpush1.msra.mxu0 %v192
      %258 = vmatprep.subr.mxu0 0.0
      %259 = vmatpush1.msra.mxu0 %v193
      %260 = vmatprep.subr.mxu0 0.0
      %261 = vmatpush1.msra.mxu0 %v194
      %262 = vmatprep.subr.mxu0 0.0
      %263 = vmatpush1.msra.mxu0 %v195
      %264 = vmatprep.subr.mxu0 0.0
      %265 = vmatpush1.msra.mxu0 %v196
      %266 = vmatprep.subr.mxu0 0.0
      %267 = vmatpush1.msra.mxu0 %v197
      %268 = vmatprep.subr.mxu0 0.0
      %269 = vmatpush1.msra.mxu0 %v198
      %270 = vmatprep.subr.mxu0 0.0
      %271 = vmatpush1.msra.mxu0 %v199
      %272 = vmatprep.subr.mxu0 0.0
      %273 = vmatpush1.msra.mxu0 %v200
      %274 = vmatprep.subr.mxu0 0.0
      %275 = vmatpush1.msra.mxu0 %v201
      %276 = vmatprep.subr.mxu0 0.0
      %277 = vmatpush1.msra.mxu0 %v202
      %278 = vmatprep.subr.mxu0 0.0
      %279 = vmatpush1.msra.mxu0 %v203
      %280 = vmatprep.subr.mxu0 0.0
      %281 = vmatpush1.msra.mxu0 %v204
      %282 = vmatprep.subr.mxu0 0.0
      %283 = vmatpush1.msra.mxu0 %v205
      %284 = vmatprep.subr.mxu0 0.0
      %285 = vmatpush1.msra.mxu0 %v206
      %286 = vmatprep.subr.mxu0 0.0
      %287 = vmatpush1.msra.mxu0 %v207
      %288 = vmatprep.subr.mxu0 0.0
      %289 = vmatpush1.msra.mxu0 %v208
      %290 = vmatprep.subr.mxu0 0.0
      %291 = vmatpush1.msra.mxu0 %v209
      %292 = vmatprep.subr.mxu0 0.0
      %293 = vmatpush1.msra.mxu0 %v210
      %294 = vmatprep.subr.mxu0 0.0
      %295 = vmatpush1.msra.mxu0 %v211
      %296 = vmatprep.subr.mxu0 0.0
      %297 = vmatpush1.msra.mxu0 %v212
      %298 = vmatprep.subr.mxu0 0.0
      %299 = vmatpush1.msra.mxu0 %v213
      %300 = vmatprep.subr.mxu0 0.0
      %301 = vmatpush1.msra.mxu0 %v214
      %302 = vmatprep.mubr.f32.mxu0 %v175
      %303 = vmatmul.mubr.f32.gmra.mrb[0].mxu0 %v171
      %v304 = vpop.f32.mrb[0].mxu0
      %v305 = vadd.f32 %v236, %v304
      %v306 = vpop.f32.mrb[0].mxu0
      %307 = vmatprep.mubr.f32.mxu0 %v176
      %308 = vmatmul.mubr.f32.gmra.mrb[0].mxu0 %v172
      %v309 = vpop.f32.mrb[0].mxu0
      %v310 = vadd.f32 %v236, %v309
      %v311 = vpop.f32.mrb[0].mxu0
      %312 = vmatprep.mubr.f32.mxu0 %v177
      %313 = vmatmul.mubr.f32.gmra.mrb[0].mxu0 %v173
      %v314 = vpop.f32.mrb[0].mxu0
      %v315 = vadd.f32 %v236, %v314
      %v316 = vpop.f32.mrb[0].mxu0
      %317 = vmatprep.mubr.f32.mxu0 %v178
      %318 = vmatmul.mubr.f32.gmra.mrb[0].mxu0 %v174
      %v319 = vpop.f32.mrb[0].mxu0
      %v320 = vadd.f32 %v236, %v319
      %v321 = vpop.f32.mrb[0].mxu0
      %322 = vdwg.mxu0
      %323 = vmatprep.subr.mxu0 0.0
      %324 = vmatpush1.msra.mxu0 %v215
      %325 = vmatprep.subr.mxu0 0.0
      %326 = vmatpush1.msra.mxu0 %v216
      %327 = vmatprep.subr.mxu0 0.0
      %328 = vmatpush1.msra.mxu0 %v217
      %329 = vmatprep.subr.mxu0 0.0
      %330 = vmatpush1.msra.mxu0 %v218
      %331 = vmatprep.subr.mxu0 0.0
      %332 = vmatpush1.msra.mxu0 %v219
      %333 = vmatprep.subr.mxu0 0.0
      %334 = vmatpush1.msra.mxu0 %v220
      %335 = vmatprep.subr.mxu0 0.0
      %336 = vmatpush1.msra.mxu0 %v221
      %337 = vmatprep.subr.mxu0 0.0
      %338 = vmatpush1.msra.mxu0 %v222
      %339 = vmatprep.subr.mxu0 0.0
      %340 = vmatpush1.msra.mxu0 %v223
      %341 = vmatprep.subr.mxu0 0.0
      %342 = vmatpush1.msra.mxu0 %v224
      %343 = vmatprep.subr.mxu0 0.0
      %344 = vmatpush1.msra.mxu0 %v225
      %345 = vmatprep.subr.mxu0 0.0
      %346 = vmatpush1.msra.mxu0 %v226
      %347 = vmatprep.subr.mxu0 0.0
      %348 = vmatpush1.msra.mxu0 %v227
      %349 = vmatprep.subr.mxu0 0.0
      %350 = vmatpush1.msra.mxu0 %v228
      %351 = vmatprep.subr.mxu0 0.0
      %352 = vmatpush1.msra.mxu0 %v229
      %353 = vmatprep.subr.mxu0 0.0
      %354 = vmatpush1.msra.mxu0 %v230
      %355 = vmatprep.subr.mxu0 0.0
      %356 = vmatpush1.msra.mxu0 0.0
      %357 = vmatprep.subr.mxu0 0.0
      %358 = vmatpush1.msra.mxu0 0.0
      %359 = vmatprep.subr.mxu0 0.0
      %360 = vmatpush1.msra.mxu0 0.0
      %361 = vmatprep.subr.mxu0 0.0
      %362 = vmatpush1.msra.mxu0 0.0
      %363 = vmatprep.subr.mxu0 0.0
      %364 = vmatpush1.msra.mxu0 0.0
      %365 = vmatprep.subr.mxu0 0.0
      %366 = vmatpush1.msra.mxu0 0.0
      %367 = vmatprep.subr.mxu0 0.0
      %368 = vmatpush1.msra.mxu0 0.0
      %369 = vmatprep.subr.mxu0 0.0
      %370 = vmatpush1.msra.mxu0 0.0
      %371 = vmatprep.subr.mxu0 0.0
      %372 = vmatpush1.msra.mxu0 0.0
      %373 = vmatprep.subr.mxu0 0.0
      %374 = vmatpush1.msra.mxu0 0.0
      %375 = vmatprep.subr.mxu0 0.0
      %376 = vmatpush1.msra.mxu0 0.0
      %377 = vmatprep.subr.mxu0 0.0
      %378 = vmatpush1.msra.mxu0 0.0
      %379 = vmatprep.subr.mxu0 0.0
      %380 = vmatpush1.msra.mxu0 0.0
      %381 = vmatprep.subr.mxu0 0.0
      %382 = vmatpush1.msra.mxu0 0.0
      %383 = vmatprep.subr.mxu0 0.0
      %384 = vmatpush1.msra.mxu0 0.0
      %385 = vmatprep.subr.mxu0 0.0
      %386 = vmatpush1.msra.mxu0 0.0
      %387 = vmatprep.mubr.f32.mxu0 0.0
      %388 = vmatmul.mubr.f32.gmra.mrb[0].mxu0 %v179
      %v389 = vpop.f32.mrb[0].mxu0
      %v390 = vadd.f32 %v305, %v389
      %v391 = vpop.f32.mrb[0].mxu0
      %392 = vmatprep.mubr.f32.mxu0 0.0
      %393 = vmatmul.mubr.f32.gmra.mrb[0].mxu0 %v180
      %v394 = vpop.f32.mrb[0].mxu0
      %v395 = vadd.f32 %v310, %v394
      %v396 = vpop.f32.mrb[0].mxu0
      %397 = vmatprep.mubr.f32.mxu0 0.0
      %398 = vmatmul.mubr.f32.gmra.mrb[0].mxu0 %v181
      %v399 = vpop.f32.mrb[0].mxu0
      %v400 = vadd.f32 %v315, %v399
      %v401 = vpop.f32.mrb[0].mxu0
      %402 = vmatprep.mubr.f32.mxu0 0.0
      %403 = vmatmul.mubr.f32.gmra.mrb[0].mxu0 %v182
      %v404 = vpop.f32.mrb[0].mxu0
      %v405 = vadd.f32 %v320, %v404
      %v406 = vpop.f32.mrb[0].mxu0
      %407 = vdwg.mxu0
      %408 = vst [vmem:[%s170] sm:$0xff] 0.0
      %409 = vst [vmem:[%s170 + $0x28] sm:$0xff] 0.0
      %410 = vst [vmem:[%s170 + $0x8] sm:$0xff] %v390
      %411 = vst [vmem:[%s170 + $0x10] sm:$0xff] %v395
      %412 = vst [vmem:[%s170 + $0x18] sm:$0xff] %v400
      %413 = vst [vmem:[%s170 + $0x20] sm:$0xff] %v405
      %p414 = scmp.lt.s32.totalorder %s14, 1
      %s415 = scalar_select %p414, %s14, 1
      %s416 = smul.addr %s415, 6
      %s417 = smul.addr %s416, 8
      %s418 = scalar_lea.vmem %s3, %s417
      // Predicated region
      $region33: #{wavenet_forward.3} parent=31 // pred_check
        %p419 = pneg %p100
      $region34: #{wavenet_forward.3} parent=31 // pred_check_branch
        %421 = sbr.rel (%p419) target = $region36
      $region35: #{wavenet_forward.3} parent=31 // pred_region
        _
      $region36: #{wavenet_forward.3} parent=31 // pred_fallthru
        _
    $region32: #{wavenet_forward.3} parent=5 // pred_fallthru
      _
    %p422 = scmp.le.s32.totalorder 2, %s9
    // Predicated region
    $region37: #{wavenet_forward.3} parent=5 // pred_check
      %p423 = pneg %p422
    $region38: #{wavenet_forward.3} parent=5 // pred_check_branch
      %425 = sbr.rel (%p423) target = $region40
    $region39: #{wavenet_forward.3} parent=5 // pred_region
      %s426 = ssub.s32 %s9, 2
      // Predicated region
      $region41: #{wavenet_forward.3} parent=39 // pred_check
        %p427 = pneg %p106
      $region42: #{wavenet_forward.3} parent=39 // pred_check_branch
        %429 = sbr.rel (%p427) target = $region44
      $region43: #{wavenet_forward.3} parent=39 // pred_region
        %p430 = scmp.lt.s32.totalorder %s15, 1
        %s431 = scalar_select %p430, %s15, 1
        %s432 = smul.addr %s431, 6
        %s433 = smul.addr %s432, 8
        %s434 = scalar_lea.vmem %s3, %s433
      $region44: #{wavenet_forward.3} parent=39 // pred_fallthru
        _
    $region40: #{wavenet_forward.3} parent=5 // pred_fallthru
      _
  $region6: #{wavenet_forward.3} parent=0 // loop_footer
    %s13 = sadd.s32 1, %s9
  $region7: #{wavenet_forward.3} parent=0 // loop_footer_branch
    %8 = sbr.rel target = $region3
  $region8: #{wavenet_forward.3} parent=0 // loop_exit
    _

// kernel: wavenet_forward.4
$region0: #{wavenet_forward.4}
  #allocation0 [shape = 'u32[]', space=smem, size = 0x4, offset = 0x4, fixed_abs, tag = 'smem constant byte address 0x4 - core index']
  #allocation1 [shape = 'u32[144,128]{1,0:T(1,128)}', space=vmem, size = 0x12000, scoped, tag = 'internal scratch']
  #allocation2 [shape = 's32[1]{0}', space=sflag, size = 0x4, scoped, tag = 'scoped memory for wavenet_forward.4']
  #allocation3 [shape = 'u8[2048]{0}', space=smem, size = 0x800, scoped, tag = 'prefetched SMEM operand 0']
  %s0 = inlined_call_operand.vmem [shape: s32[3,3], index: 0, kind: input, shape index: {}]
  %s1 = inlined_call_operand.vmem [shape: f32[1,2,48,128], index: 1, kind: input, shape index: {}]
  %s2 = inlined_call_operand.vmem [shape: f32[3,512,256], index: 2, kind: input, shape index: {}]
  %s3 = inlined_call_operand.vmem [shape: f32[3,1,256], index: 3, kind: input, shape index: {}]
  %s4 = inlined_call_operand.vmem [shape: f32[3,2,48,128], index: 4, kind: output, shape index: {}]
  %s5 = sld [smem:[#allocation0]]
  $region45: #{wavenet_forward.4} parent=0
    _
  %s7 = ssub.s32 1, %s5
  %s8 = scalar_select 0, %s7, %s5
  %s9 = sshll.u32 %s0, 4
  %s10 = int_to_ptr.vmem [resolvable:$true] %s9
  %12 = dma.vmem_to_smem %s10, 64, [#allocation3], [#allocation2]
  %13 = dma.done [#allocation2], 64
  %14 = sfence
  loop: start=0, step=1, limit=8
  $region2: #{wavenet_forward.4} parent=0 // loop_pre_header
    _
  $region3: #{wavenet_forward.4} parent=0 // loop_header
    %s16 = sphi 0, %s20
    %p17 = scmp.ge.s32.totalorder %s16, 8
    %s23 = sphi 0, %s35
    %s24 = sphi 0, %s31
    %s25 = sphi 0, %s23
    %s26 = sphi 0, %s24
    %s27 = sphi 0, %s25
    %s28 = sphi 0, %s26
    %s38 = sphi 0, %s40
    %s41 = sphi 0, %s38
    %s42 = sphi 0, %s41
    %s58 = sphi 0, %s42
    %s64 = sphi 0, %s66
    %s67 = sphi 0, %s64
    %s68 = sphi 0, %s67
    %s84 = sphi 0, %s68
    %s90 = sphi 0, %s92
    %s93 = sphi 0, %s90
    %s94 = sphi 0, %s93
    %s110 = sphi 0, %s94
    %s118 = sphi 0, %s120
    %s121 = sphi 0, %s118
    %s122 = sphi 0, %s121
    %s138 = sphi 0, %s122
  $region4: #{wavenet_forward.4} parent=0 // loop_header_branch
    %19 = sbr.rel (%p17) target = $region8
  $region5: #{wavenet_forward.4} parent=0 // loop_body
    %s21 = ssub.s32 %s16, 1
    %s22 = ssub.s32 %s16, 2
    %s29 = sadd.s32 1, %s24
    %p30 = scmp.ge.s32.totalorder %s29, 2
    %s31 = scalar_select %p30, 0, %s29
    %s32 = sadd.s32 1, %s23
    %s33 = scalar_select %p30, %s32, %s23
    %p34 = scmp.ge.s32.totalorder %s33, 3
    %s35 = scalar_select %p34, 0, %s33
    %s36 = ssub.s32 %s24, %s31
    %p37 = scmp.eq.s32.totalorder %s36, 0
    %s39 = sadd.s32 %s38, 1
    %s40 = scalar_select %p37, %s38, %s39
    %p43 = pneg %p37
    %p44 = scmp.eq.s32.totalorder %s16, 5
    %p45 = por %p43, %p44
    %p46 = scmp.ne.s32.totalorder %s38, %s41
    %p47 = scmp.eq.s32.totalorder %s16, 0
    %p48 = por %p46, %p47
    %p49 = scmp.ne.s32.totalorder %s38, %s41
    %p50 = scmp.eq.s32.totalorder %s21, 5
    %p51 = por %p49, %p50
    %p52 = scmp.ne.s32.totalorder %s41, %s42
    %p53 = scmp.eq.s32.totalorder %s21, 0
    %p54 = por %p52, %p53
    %p55 = scmp.ne.s32.totalorder %s41, %s42
    %p56 = scmp.eq.s32.totalorder %s22, 5
    %p57 = por %p55, %p56
    %p59 = scmp.ne.s32.totalorder %s42, %s58
    %p60 = scmp.eq.s32.totalorder %s22, 0
    %p61 = por %p59, %p60
    %s62 = ssub.s32 %s23, %s35
    %p63 = scmp.eq.s32.totalorder %s62, 0
    %s65 = sadd.s32 %s64, 1
    %s66 = scalar_select %p63, %s64, %s65
    %p69 = pneg %p63
    %p70 = scmp.eq.s32.totalorder %s16, 5
    %p71 = por %p69, %p70
    %p72 = scmp.ne.s32.totalorder %s64, %s67
    %p73 = scmp.eq.s32.totalorder %s16, 0
    %p74 = por %p72, %p73
    %p75 = scmp.ne.s32.totalorder %s64, %s67
    %p76 = scmp.eq.s32.totalorder %s21, 5
    %p77 = por %p75, %p76
    %p78 = scmp.ne.s32.totalorder %s67, %s68
    %p79 = scmp.eq.s32.totalorder %s21, 0
    %p80 = por %p78, %p79
    %p81 = scmp.ne.s32.totalorder %s67, %s68
    %p82 = scmp.eq.s32.totalorder %s22, 5
    %p83 = por %p81, %p82
    %p85 = scmp.ne.s32.totalorder %s68, %s84
    %p86 = scmp.eq.s32.totalorder %s22, 0
    %p87 = por %p85, %p86
    %s88 = ssub.s32 %s23, %s35
    %p89 = scmp.eq.s32.totalorder %s88, 0
    %s91 = sadd.s32 %s90, 1
    %s92 = scalar_select %p89, %s90, %s91
    %p95 = pneg %p89
    %p96 = scmp.eq.s32.totalorder %s16, 5
    %p97 = por %p95, %p96
    %p98 = scmp.ne.s32.totalorder %s90, %s93
    %p99 = scmp.eq.s32.totalorder %s16, 0
    %p100 = por %p98, %p99
    %p101 = scmp.ne.s32.totalorder %s90, %s93
    %p102 = scmp.eq.s32.totalorder %s21, 5
    %p103 = por %p101, %p102
    %p104 = scmp.ne.s32.totalorder %s93, %s94
    %p105 = scmp.eq.s32.totalorder %s21, 0
    %p106 = por %p104, %p105
    %p107 = scmp.ne.s32.totalorder %s93, %s94
    %p108 = scmp.eq.s32.totalorder %s22, 5
    %p109 = por %p107, %p108
    %p111 = scmp.ne.s32.totalorder %s94, %s110
    %p112 = scmp.eq.s32.totalorder %s22, 0
    %p113 = por %p111, %p112
    %s114 = ssub.s32 %s23, %s35
    %s115 = ssub.s32 %s24, %s31
    %s116 = sor.u32 %s114, %s115
    %p117 = scmp.eq.s32.totalorder %s116, 0
    %s119 = sadd.s32 %s118, 1
    %s120 = scalar_select %p117, %s118, %s119
    %p123 = pneg %p117
    %p124 = scmp.eq.s32.totalorder %s16, 5
    %p125 = por %p123, %p124
    %p126 = scmp.ne.s32.totalorder %s118, %s121
    %p127 = scmp.eq.s32.totalorder %s16, 0
    %p128 = por %p126, %p127
    %p129 = scmp.ne.s32.totalorder %s118, %s121
    %p130 = scmp.eq.s32.totalorder %s21, 5
    %p131 = por %p129, %p130
    %p132 = scmp.ne.s32.totalorder %s121, %s122
    %p133 = scmp.eq.s32.totalorder %s21, 0
    %p134 = por %p132, %p133
    %p135 = scmp.ne.s32.totalorder %s121, %s122
    %p136 = scmp.eq.s32.totalorder %s22, 5
    %p137 = por %p135, %p136
    %p139 = scmp.ne.s32.totalorder %s122, %s138
    %p140 = scmp.eq.s32.totalorder %s22, 0
    %p141 = por %p139, %p140
    %p142 = scmp.le.s32.totalorder 1, %s16
    %p143 = scmp.lt.s32.totalorder %s16, 7
    %p144 = pnand %p142, %p143
    %p145 = pneg %p144
    // Predicated region
    $region9: #{wavenet_forward.4} parent=5 // pred_check
      _
    $region10: #{wavenet_forward.4} parent=5 // pred_check_branch
      %147 = sbr.rel (%p144) target = $region12
    $region11: #{wavenet_forward.4} parent=5 // pred_region
      %s148 = ssub.s32 %s16, 1
    $region12: #{wavenet_forward.4} parent=5 // pred_fallthru
      _
    %p149 = scmp.lt.s32.totalorder %s16, 6
    // Predicated region
    $region13: #{wavenet_forward.4} parent=5 // pred_check
      %p150 = pneg %p149
    $region14: #{wavenet_forward.4} parent=5 // pred_check_branch
      %152 = sbr.rel (%p150) target = $region16
    $region15: #{wavenet_forward.4} parent=5 // pred_region
      // Predicated region
      $region17: #{wavenet_forward.4} parent=15 // pred_check
        %p153 = pneg %p48
      $region18: #{wavenet_forward.4} parent=15 // pred_check_branch
        %155 = sbr.rel (%p153) target = $region20
      $region19: #{wavenet_forward.4} parent=15 // pred_region
        %p156 = scmp.lt.s32.totalorder %s24, 1
        %s157 = scalar_select %p156, %s24, 1
        %s158 = smul.addr %s157, 6
        %s159 = smul.addr %s158, 8
        %s160 = scalar_lea.vmem %s1, %s159
      $region20: #{wavenet_forward.4} parent=15 // pred_fallthru
        _
      // Predicated region
      $region21: #{wavenet_forward.4} parent=15 // pred_check
        %p161 = pneg %p74
      $region22: #{wavenet_forward.4} parent=15 // pred_check_branch
        %163 = sbr.rel (%p161) target = $region24
      $region23: #{wavenet_forward.4} parent=15 // pred_region
        %p164 = scmp.lt.s32.totalorder %s23, 2
        %s165 = scalar_select %p164, %s23, 2
        %s166 = smul.addr %s165, 128
        %s167 = smul.addr %s166, 8
        %s168 = scalar_lea.vmem %s2, %s167
      $region24: #{wavenet_forward.4} parent=15 // pred_fallthru
        _
      // Predicated region
      $region25: #{wavenet_forward.4} parent=15 // pred_check
        %p169 = pneg %p100
      $region26: #{wavenet_forward.4} parent=15 // pred_check_branch
        %171 = sbr.rel (%p169) target = $region28
      $region27: #{wavenet_forward.4} parent=15 // pred_region
        %p172 = scmp.lt.s32.totalorder %s23, 2
        %s173 = scalar_select %p172, %s23, 2
        %s174 = smul.addr %s173, 2
        %s175 = scalar_lea.vmem %s3, %s174
      $region28: #{wavenet_forward.4} parent=15 // pred_fallthru
        _
    $region16: #{wavenet_forward.4} parent=5 // pred_fallthru
      _
    %p176 = scmp.le.s32.totalorder 1, %s16
    %p177 = scmp.lt.s32.totalorder %s16, 7
    %p178 = pnand %p176, %p177
    %p179 = pneg %p178
    // Predicated region
    $region29: #{wavenet_forward.4} parent=5 // pred_check
      _
    $region30: #{wavenet_forward.4} parent=5 // pred_check_branch
      %181 = sbr.rel (%p178) target = $region32
    $region31: #{wavenet_forward.4} parent=5 // pred_region
      %s182 = ssub.s32 %s16, 1
      %p183 = scmp.lt.s32.totalorder %s26, 1
      %s184 = scalar_select %p183, %s26, 1
      %s185 = smul.addr %s184, 6
      %s186 = smul.addr %s185, 8
      %s187 = scalar_lea.vmem %s1, %s186
      %p188 = pneg %p54
      %p189 = pneg %p51
      %p190 = scmp.lt.s32.totalorder %s25, 2
      %s191 = scalar_select %p190, %s25, 2
      %s192 = smul.addr %s191, 128
      %s193 = smul.addr %s192, 8
      %s194 = scalar_lea.vmem %s2, %s193
      %p195 = pneg %p80
      %p196 = pneg %p77
      %p197 = scmp.lt.s32.totalorder %s25, 2
      %s198 = scalar_select %p197, %s25, 2
      %s199 = smul.addr %s198, 2
      %s200 = scalar_lea.vmem %s3, %s199
      %p201 = pneg %p106
      %p202 = pneg %p103
      %p203 = pneg %p134
      %p204 = pneg %p131
      %p205 = scmp.lt.s32.totalorder %s25, 2
      %s206 = scalar_select %p205, %s25, 2
      %p207 = scmp.lt.s32.totalorder %s26, 1
      %s208 = scalar_select %p207, %s26, 1
      %s209 = smul.addr %s208, 6
      %s210 = smul.addr %s206, 12
      %s211 = sadd.s32 %s209, %s210
      %s212 = smul.addr %s211, 8
      %s213 = scalar_lea.vmem %s4, %s212
      %p214 = scmp.lt.s32.totalorder %s26, 1
      %s215 = scalar_select %p214, %s26, 1
      %s216 = smul.addr %s215, 6
      %s217 = smul.addr %s216, 8
      %s218 = scalar_lea.vmem %s1, %s217
      %p219 = scmp.lt.s32.totalorder %s25, 2
      %s220 = scalar_select %p219, %s25, 2
      %s221 = smul.addr %s220, 128
      %s222 = smul.addr %s221, 8
      %s223 = scalar_lea.vmem %s2, %s222
      %p224 = scmp.lt.s32.totalorder %s25, 2
      %s225 = scalar_select %p224, %s25, 2
      %s226 = smul.addr %s225, 2
      %s227 = scalar_lea.vmem %s3, %s226
      %p228 = scmp.lt.s32.totalorder %s25, 2
      %s229 = scalar_select %p228, %s25, 2
      %p230 = scmp.lt.s32.totalorder %s26, 1
      %s231 = scalar_select %p230, %s26, 1
      %s232 = smul.addr %s231, 6
      %s233 = smul.addr %s229, 12
      %s234 = sadd.s32 %s232, %s233
      %s235 = smul.addr %s234, 8
      %s236 = scalar_lea.vmem %s4, %s235
      %s237 = smul.u32 %s25, 128
      %s238 = sld [smem:[#allocation3 + %s237]]
      %s239 = scalar_lea.vmem %s218, %s238
      %v240 = vld [vmem:[%s239] sm:$0xff]
      %v241 = vld [vmem:[%s239 + $0x8] sm:$0xff]
      %v242 = vld [vmem:[%s239 + $0x10] sm:$0xff]
      %v243 = vld [vmem:[%s239 + $0x18] sm:$0xff]
      %s244 = sadd.s32 %s237, 1
      %s245 = sld [smem:[#allocation3 + %s244]]
      %s246 = scalar_lea.vmem %s218, %s245
      %v247 = vld [vmem:[%s246] sm:$0xff]
      %v248 = vld [vmem:[%s246 + $0x8] sm:$0xff]
      %v249 = vld [vmem:[%s246 + $0x10] sm:$0xff]
      %v250 = vld [vmem:[%s246 + $0x18] sm:$0xff]
      %s251 = sadd.s32 %s237, 2
      %s252 = sld [smem:[#allocation3 + %s251]]
      %s253 = scalar_lea.vmem %s218, %s252
      %v254 = vld [vmem:[%s253] sm:$0xff]
      %v255 = vld [vmem:[%s253 + $0x8] sm:$0xff]
      %v256 = vld [vmem:[%s253 + $0x10] sm:$0xff]
      %v257 = vld [vmem:[%s253 + $0x18] sm:$0xff]
      %v258 = vld [vmem:[%s218 + $0x8] sm:$0xff]
      %v259 = vld [vmem:[%s218 + $0x10] sm:$0xff]
      %v260 = vld [vmem:[%s218 + $0x18] sm:$0xff]
      %v261 = vld [vmem:[%s218 + $0x20] sm:$0xff]
      %v262 = vld [vmem:[%s223] sm:$0xff]
      %v263 = vld [vmem:[%s223 + $0x8] sm:$0xff]
      %v264 = vld [vmem:[%s223 + $0x10] sm:$0xff]
      %v265 = vld [vmem:[%s223 + $0x18] sm:$0xff]
      %v266 = vld [vmem:[%s223 + $0x20] sm:$0xff]
      %v267 = vld [vmem:[%s223 + $0x28] sm:$0xff]
      %v268 = vld [vmem:[%s223 + $0x30] sm:$0xff]
      %v269 = vld [vmem:[%s223 + $0x38] sm:$0xff]
      %v270 = vld [vmem:[%s223 + $0x40] sm:$0xff]
      %v271 = vld [vmem:[%s223 + $0x48] sm:$0xff]
      %v272 = vld [vmem:[%s223 + $0x50] sm:$0xff]
      %v273 = vld [vmem:[%s223 + $0x58] sm:$0xff]
      %v274 = vld [vmem:[%s223 + $0x60] sm:$0xff]
      %v275 = vld [vmem:[%s223 + $0x68] sm:$0xff]
      %v276 = vld [vmem:[%s223 + $0x70] sm:$0xff]
      %v277 = vld [vmem:[%s223 + $0x78] sm:$0xff]
      %v278 = vld [vmem:[%s223 + $0x80] sm:$0xff]
      %v279 = vld [vmem:[%s223 + $0x88] sm:$0xff]
      %v280 = vld [vmem:[%s223 + $0x90] sm:$0xff]
      %v281 = vld [vmem:[%s223 + $0x98] sm:$0xff]
      %v282 = vld [vmem:[%s223 + $0xa0] sm:$0xff]
      %v283 = vld [vmem:[%s223 + $0xa8] sm:$0xff]
      %v284 = vld [vmem:[%s223 + $0xb0] sm:$0xff]
      %v285 = vld [vmem:[%s223 + $0xb8] sm:$0xff]
      %v286 = vld [vmem:[%s223 + $0xc0] sm:$0xff]
      %v287 = vld [vmem:[%s223 + $0xc8] sm:$0xff]
      %v288 = vld [vmem:[%s223 + $0xd0] sm:$0xff]
      %v289 = vld [vmem:[%s223 + $0xd8] sm:$0xff]
      %v290 = vld [vmem:[%s223 + $0xe0] sm:$0xff]
      %v291 = vld [vmem:[%s223 + $0xe8] sm:$0xff]
      %v292 = vld [vmem:[%s223 + $0xf0] sm:$0xff]
      %v293 = vld [vmem:[%s223 + $0xf8] sm:$0xff]
      %v294 = vld [vmem:[%s223 + $0x100] sm:$0xff]
      %v295 = vld [vmem:[%s223 + $0x108] sm:$0xff]
      %v296 = vld [vmem:[%s223 + $0x110] sm:$0xff]
      %v297 = vld [vmem:[%s223 + $0x118] sm:$0xff]
      %v298 = vld [vmem:[%s223 + $0x120] sm:$0xff]
      %v299 = vld [vmem:[%s223 + $0x128] sm:$0xff]
      %v300 = vld [vmem:[%s223 + $0x130] sm:$0xff]
      %v301 = vld [vmem:[%s223 + $0x138] sm:$0xff]
      %v302 = vld [vmem:[%s223 + $0x140] sm:$0xff]
      %v303 = vld [vmem:[%s223 + $0x148] sm:$0xff]
      %v304 = vld [vmem:[%s223 + $0x150] sm:$0xff]
      %v305 = vld [vmem:[%s223 + $0x158] sm:$0xff]
      %v306 = vld [vmem:[%s223 + $0x160] sm:$0xff]
      %v307 = vld [vmem:[%s223 + $0x168] sm:$0xff]
      %v308 = vld [vmem:[%s223 + $0x170] sm:$0xff]
      %v309 = vld [vmem:[%s223 + $0x178] sm:$0xff]
      %v310 = vld [vmem:[%s223 + $0x180] sm:$0xff]
      %v311 = vld [vmem:[%s223 + $0x188] sm:$0xff]
      %v312 = vld [vmem:[%s223 + $0x190] sm:$0xff]
      %v313 = vld [vmem:[%s223 + $0x198] sm:$0xff]
      %v314 = vld [vmem:[%s223 + $0x1a0] sm:$0xff]
      %v315 = vld [vmem:[%s223 + $0x1a8] sm:$0xff]
      %v316 = vld [vmem:[%s223 + $0x1b0] sm:$0xff]
      %v317 = vld [vmem:[%s223 + $0x1b8] sm:$0xff]
      %v318 = vld [vmem:[%s223 + $0x1c0] sm:$0xff]
      %v319 = vld [vmem:[%s223 + $0x1c8] sm:$0xff]
      %v320 = vld [vmem:[%s223 + $0x1d0] sm:$0xff]
      %v321 = vld [vmem:[%s223 + $0x1d8] sm:$0xff]
      %v322 = vld [vmem:[%s223 + $0x1e0] sm:$0xff]
      %v323 = vld [vmem:[%s223 + $0x1e8] sm:$0xff]
      %v324 = vld [vmem:[%s223 + $0x1f0] sm:$0xff]
      %v325 = vld [vmem:[%s223 + $0x1f8] sm:$0xff]
      %v326 = vld [vmem:[%s223 + $0x200] sm:$0xff]
      %v327 = vld [vmem:[%s223 + $0x208] sm:$0xff]
      %v328 = vld [vmem:[%s223 + $0x210] sm:$0xff]
      %v329 = vld [vmem:[%s223 + $0x218] sm:$0xff]
      %v330 = vld [vmem:[%s223 + $0x220] sm:$0xff]
      %v331 = vld [vmem:[%s223 + $0x228] sm:$0xff]
      %v332 = vld [vmem:[%s223 + $0x230] sm:$0xff]
      %v333 = vld [vmem:[%s223 + $0x238] sm:$0xff]
      %v334 = vld [vmem:[%s223 + $0x240] sm:$0xff]
      %v335 = vld [vmem:[%s223 + $0x248] sm:$0xff]
      %v336 = vld [vmem:[%s223 + $0x250] sm:$0xff]
      %v337 = vld [vmem:[%s223 + $0x258] sm:$0xff]
      %v338 = vld [vmem:[%s223 + $0x260] sm:$0xff]
      %v339 = vld [vmem:[%s223 + $0x268] sm:$0xff]
      %v340 = vld [vmem:[%s223 + $0x270] sm:$0xff]
      %v341 = vld [vmem:[%s223 + $0x278] sm:$0xff]
      %v342 = vld [vmem:[%s223 + $0x280] sm:$0xff]
      %v343 = vld [vmem:[%s223 + $0x288] sm:$0xff]
      %v344 = vld [vmem:[%s223 + $0x290] sm:$0xff]
      %v345 = vld [vmem:[%s223 + $0x298] sm:$0xff]
      %v346 = vld [vmem:[%s223 + $0x2a0] sm:$0xff]
      %v347 = vld [vmem:[%s223 + $0x2a8] sm:$0xff]
      %v348 = vld [vmem:[%s223 + $0x2b0] sm:$0xff]
      %v349 = vld [vmem:[%s223 + $0x2b8] sm:$0xff]
      %v350 = vld [vmem:[%s223 + $0x2c0] sm:$0xff]
      %v351 = vld [vmem:[%s223 + $0x2c8] sm:$0xff]
      %v352 = vld [vmem:[%s223 + $0x2d0] sm:$0xff]
      %v353 = vld [vmem:[%s223 + $0x2d8] sm:$0xff]
      %v354 = vld [vmem:[%s223 + $0x2e0] sm:$0xff]
      %v355 = vld [vmem:[%s223 + $0x2e8] sm:$0xff]
      %v356 = vld [vmem:[%s223 + $0x2f0] sm:$0xff]
      %v357 = vld [vmem:[%s223 + $0x2f8] sm:$0xff]
      %v358 = vld [vmem:[%s223 + $0x300] sm:$0xff]
      %v359 = vld [vmem:[%s223 + $0x308] sm:$0xff]
      %v360 = vld [vmem:[%s223 + $0x310] sm:$0xff]
      %v361 = vld [vmem:[%s223 + $0x318] sm:$0xff]
      %v362 = vld [vmem:[%s223 + $0x320] sm:$0xff]
      %v363 = vld [vmem:[%s223 + $0x328] sm:$0xff]
      %v364 = vld [vmem:[%s223 + $0x330] sm:$0xff]
      %v365 = vld [vmem:[%s223 + $0x338] sm:$0xff]
      %v366 = vld [vmem:[%s223 + $0x340] sm:$0xff]
      %v367 = vld [vmem:[%s223 + $0x348] sm:$0xff]
      %v368 = vld [vmem:[%s223 + $0x350] sm:$0xff]
      %v369 = vld [vmem:[%s223 + $0x358] sm:$0xff]
      %v370 = vld [vmem:[%s223 + $0x360] sm:$0xff]
      %v371 = vld [vmem:[%s223 + $0x368] sm:$0xff]
      %v372 = vld [vmem:[%s223 + $0x370] sm:$0xff]
      %v373 = vld [vmem:[%s223 + $0x378] sm:$0xff]
      %v374 = vld [vmem:[%s223 + $0x380] sm:$0xff]
      %v375 = vld [vmem:[%s223 + $0x388] sm:$0xff]
      %v376 = vld [vmem:[%s223 + $0x390] sm:$0xff]
      %v377 = vld [vmem:[%s223 + $0x398] sm:$0xff]
      %v378 = vld [vmem:[%s223 + $0x3a0] sm:$0xff]
      %v379 = vld [vmem:[%s223 + $0x3a8] sm:$0xff]
      %v380 = vld [vmem:[%s223 + $0x3b0] sm:$0xff]
      %v381 = vld [vmem:[%s223 + $0x3b8] sm:$0xff]
      %v382 = vld [vmem:[%s223 + $0x3c0] sm:$0xff]
      %v383 = vld [vmem:[%s223 + $0x3c8] sm:$0xff]
      %v384 = vld [vmem:[%s223 + $0x3d0] sm:$0xff]
      %v385 = vld [vmem:[%s223 + $0x3d8] sm:$0xff]
      %v386 = vld [vmem:[%s223 + $0x3e0] sm:$0xff]
      %v387 = vld [vmem:[%s223 + $0x3e8] sm:$0xff]
      %v388 = vld [vmem:[%s223 + $0x3f0] sm:$0xff]
      %v389 = vld [vmem:[%s223 + $0x3f8] sm:$0xff]
      %v390 = vld [vmem:[%s227] sm:$0x3]
      %v392 = vlaneseq
      %v393 = vshrl.u32 %v392, 7
      %v394 = vsub.s32 0, %v393
      %v395 = vrot.slane %v390, %v394
      %v396 = vlaneseq
      %v397 = vshrl.u32 %v396, 7
      %v398 = vsub.s32 1, %v397
      %v399 = vrot.slane %v390, %v398
      %402 = vmatprep.subr.mxu0 %v263
      %403 = vmatpush1.msra.mxu0 %v262
      %404 = vmatprep.subr.mxu0 %v265
      %405 = vmatpush1.msra.mxu0 %v264
      %406 = vmatprep.subr.mxu0 %v267
      %407 = vmatpush1.msra.mxu0 %v266
      %408 = vmatprep.subr.mxu0 %v269
      %409 = vmatpush1.msra.mxu0 %v268
      %410 = vmatprep.subr.mxu0 %v271
      %411 = vmatpush1.msra.mxu0 %v270
      %412 = vmatprep.subr.mxu0 %v273
      %413 = vmatpush1.msra.mxu0 %v272
      %414 = vmatprep.subr.mxu0 %v275
      %415 = vmatpush1.msra.mxu0 %v274
      %416 = vmatprep.subr.mxu0 %v277
      %417 = vmatpush1.msra.mxu0 %v276
      %418 = vmatprep.subr.mxu0 %v279
      %419 = vmatpush1.msra.mxu0 %v278
      %420 = vmatprep.subr.mxu0 %v281
      %421 = vmatpush1.msra.mxu0 %v280
      %422 = vmatprep.subr.mxu0 %v283
      %423 = vmatpush1.msra.mxu0 %v282
      %424 = vmatprep.subr.mxu0 %v285
      %425 = vmatpush1.msra.mxu0 %v284
      %426 = vmatprep.subr.mxu0 %v287
      %427 = vmatpush1.msra.mxu0 %v286
      %428 = vmatprep.subr.mxu0 %v289
      %429 = vmatpush1.msra.mxu0 %v288
      %430 = vmatprep.subr.mxu0 %v291
      %431 = vmatpush1.msra.mxu0 %v290
      %432 = vmatprep.subr.mxu0 %v293
      %433 = vmatpush1.msra.mxu0 %v292
      %434 = vmatprep.subr.mxu0 %v295
      %435 = vmatpush1.msra.mxu0 %v294
      %436 = vmatprep.subr.mxu0 %v297
      %437 = vmatpush1.msra.mxu0 %v296
      %438 = vmatprep.subr.mxu0 %v299
      %439 = vmatpush1.msra.mxu0 %v298
      %440 = vmatprep.subr.mxu0 %v301
      %441 = vmatpush1.msra.mxu0 %v300
      %442 = vmatprep.subr.mxu0 %v303
      %443 = vmatpush1.msra.mxu0 %v302
      %444 = vmatprep.subr.mxu0 %v305
      %445 = vmatpush1.msra.mxu0 %v304
      %446 = vmatprep.subr.mxu0 %v307
      %447 = vmatpush1.msra.mxu0 %v306
      %448 = vmatprep.subr.mxu0 %v309
      %449 = vmatpush1.msra.mxu0 %v308
      %450 = vmatprep.subr.mxu0 %v311
      %451 = vmatpush1.msra.mxu0 %v310
      %452 = vmatprep.subr.mxu0 %v313
      %453 = vmatpush1.msra.mxu0 %v312
      %454 = vmatprep.subr.mxu0 %v315
      %455 = vmatpush1.msra.mxu0 %v314
      %456 = vmatprep.subr.mxu0 %v317
      %457 = vmatpush1.msra.mxu0 %v316
      %458 = vmatprep.subr.mxu0 %v319
      %459 = vmatpush1.msra.mxu0 %v318
      %460 = vmatprep.subr.mxu0 %v321
      %461 = vmatpush1.msra.mxu0 %v320
      %462 = vmatprep.subr.mxu0 %v323
      %463 = vmatpush1.msra.mxu0 %v322
      %464 = vmatprep.subr.mxu0 %v325
      %465 = vmatpush1.msra.mxu0 %v324
      %466 = vmatprep.mubr.f32.mxu0 %v247
      %467 = vmatmul.mubr.f32.gmra.mrb[0].mxu0 %v240
      %v468 = vpop.f32.mrb[0].mxu0
      %v469 = vadd.f32 %v395, %v468
      %v470 = vpop.f32.mrb[0].mxu0
      %v471 = vadd.f32 %v399, %v470
      %472 = vmatprep.mubr.f32.mxu0 %v248
      %473 = vmatmul.mubr.f32.gmra.mrb[0].mxu0 %v241
      %v474 = vpop.f32.mrb[0].mxu0
      %v475 = vadd.f32 %v395, %v474
      %v476 = vpop.f32.mrb[0].mxu0
      %v477 = vadd.f32 %v399, %v476
      %478 = vmatprep.mubr.f32.mxu0 %v249
      %479 = vmatmul.mubr.f32.gmra.mrb[0].mxu0 %v242
      %v480 = vpop.f32.mrb[0].mxu0
      %v481 = vadd.f32 %v395, %v480
      %v482 = vpop.f32.mrb[0].mxu0
      %v483 = vadd.f32 %v399, %v482
      %484 = vmatprep.mubr.f32.mxu0 %v250
      %485 = vmatmul.mubr.f32.gmra.mrb[0].mxu0 %v243
      %v486 = vpop.f32.mrb[0].mxu0
      %v487 = vadd.f32 %v395, %v486
      %v488 = vpop.f32.mrb[0].mxu0
      %v489 = vadd.f32 %v399, %v488
      %490 = vdwg.mxu0
      %491 = vmatprep.subr.mxu0 %v327
      %492 = vmatpush1.msra.mxu0 %v326
      %493 = vmatprep.subr.mxu0 %v329
      %494 = vmatpush1.msra.mxu0 %v328
      %495 = vmatprep.subr.mxu0 %v331
      %496 = vmatpush1.msra.mxu0 %v330
      %497 = vmatprep.subr.mxu0 %v333
      %498 = vmatpush1.msra.mxu0 %v332
      %499 = vmatprep.subr.mxu0 %v335
      %500 = vmatpush1.msra.mxu0 %v334
      %501 = vmatprep.subr.mxu0 %v337
      %502 = vmatpush1.msra.mxu0 %v336
      %503 = vmatprep.subr.mxu0 %v339
      %504 = vmatpush1.msra.mxu0 %v338
      %505 = vmatprep.subr.mxu0 %v341
      %506 = vmatpush1.msra.mxu0 %v340
      %507 = vmatprep.subr.mxu0 %v343
      %508 = vmatpush1.msra.mxu0 %v342
      %509 = vmatprep.subr.mxu0 %v345
      %510 = vmatpush1.msra.mxu0 %v344
      %511 = vmatprep.subr.mxu0 %v347
      %512 = vmatpush1.msra.mxu0 %v346
      %513 = vmatprep.subr.mxu0 %v349
      %514 = vmatpush1.msra.mxu0 %v348
      %515 = vmatprep.subr.mxu0 %v351
      %516 = vmatpush1.msra.mxu0 %v350
      %517 = vmatprep.subr.mxu0 %v353
      %518 = vmatpush1.msra.mxu0 %v352
      %519 = vmatprep.subr.mxu0 %v355
      %520 = vmatpush1.msra.mxu0 %v354
      %521 = vmatprep.subr.mxu0 %v357
      %522 = vmatpush1.msra.mxu0 %v356
      %523 = vmatprep.subr.mxu0 %v359
      %524 = vmatpush1.msra.mxu0 %v358
      %525 = vmatprep.subr.mxu0 %v361
      %526 = vmatpush1.msra.mxu0 %v360
      %527 = vmatprep.subr.mxu0 %v363
      %528 = vmatpush1.msra.mxu0 %v362
      %529 = vmatprep.subr.mxu0 %v365
      %530 = vmatpush1.msra.mxu0 %v364
      %531 = vmatprep.subr.mxu0 %v367
      %532 = vmatpush1.msra.mxu0 %v366
      %533 = vmatprep.subr.mxu0 %v369
      %534 = vmatpush1.msra.mxu0 %v368
      %535 = vmatprep.subr.mxu0 %v371
      %536 = vmatpush1.msra.mxu0 %v370
      %537 = vmatprep.subr.mxu0 %v373
      %538 = vmatpush1.msra.mxu0 %v372
      %539 = vmatprep.subr.mxu0 %v375
      %540 = vmatpush1.msra.mxu0 %v374
      %541 = vmatprep.subr.mxu0 %v377
      %542 = vmatpush1.msra.mxu0 %v376
      %543 = vmatprep.subr.mxu0 %v379
      %544 = vmatpush1.msra.mxu0 %v378
      %545 = vmatprep.subr.mxu0 %v381
      %546 = vmatpush1.msra.mxu0 %v380
      %547 = vmatprep.subr.mxu0 %v383
      %548 = vmatpush1.msra.mxu0 %v382
      %549 = vmatprep.subr.mxu0 %v385
      %550 = vmatpush1.msra.mxu0 %v384
      %551 = vmatprep.subr.mxu0 %v387
      %552 = vmatpush1.msra.mxu0 %v386
      %553 = vmatprep.subr.mxu0 %v389
      %554 = vmatpush1.msra.mxu0 %v388
      %555 = vmatprep.mubr.f32.mxu0 %v258
      %556 = vmatmul.mubr.f32.gmra.mrb[0].mxu0 %v254
      %v557 = vpop.f32.mrb[0].mxu0
      %v558 = vadd.f32 %v469, %v557
      %v559 = vpop.f32.mrb[0].mxu0
      %v560 = vadd.f32 %v471, %v559
      %561 = vmatprep.mubr.f32.mxu0 %v259
      %562 = vmatmul.mubr.f32.gmra.mrb[0].mxu0 %v255
      %v563 = vpop.f32.mrb[0].mxu0
      %v564 = vadd.f32 %v475, %v563
      %v565 = vpop.f32.mrb[0].mxu0
      %v566 = vadd.f32 %v477, %v565
      %567 = vmatprep.mubr.f32.mxu0 %v260
      %568 = vmatmul.mubr.f32.gmra.mrb[0].mxu0 %v256
      %v569 = vpop.f32.mrb[0].mxu0
      %v570 = vadd.f32 %v481, %v569
      %v571 = vpop.f32.mrb[0].mxu0
      %v572 = vadd.f32 %v483, %v571
      %573 = vmatprep.mubr.f32.mxu0 %v261
      %574 = vmatmul.mubr.f32.gmra.mrb[0].mxu0 %v257
      %v575 = vpop.f32.mrb[0].mxu0
      %v576 = vadd.f32 %v487, %v575
      %v577 = vpop.f32.mrb[0].mxu0
      %v578 = vadd.f32 %v489, %v577
      %579 = vdwg.mxu0
      %v580 = vtanh.pop %v558
      %v581 = vtanh.pop %v564
      %v582 = vtanh.pop %v570
      %v583 = vtanh.pop %v576
      %v584 = vxor.u32 %v558, 2147483648
      %v585 = vxor.u32 %v564, 2147483648
      %v586 = vxor.u32 %v570, 2147483648
      %v587 = vxor.u32 %v576, 2147483648
      %v588 = vmul.f32 %v584, 1.442695
      %v589 = vpow.pop %v588
      %v590 = vmul.f32 %v585, 1.442695
      %v591 = vpow.pop %v590
      %v592 = vmul.f32 %v586, 1.442695
      %v593 = vpow.pop %v592
      %v594 = vmul.f32 %v587, 1.442695
      %v595 = vpow.pop %v594
      %v596 = vadd.f32 %v589, 1.0
      %v597 = vadd.f32 %v591, 1.0
      %v598 = vadd.f32 %v593, 1.0
      %v599 = vadd.f32 %v595, 1.0
      %v600 = vrcp.pop %v596
      %v601 = vmul.f32 1.0, %v600
      %v602 = vrcp.pop %v597
      %v603 = vmul.f32 1.0, %v602
      %v604 = vrcp.pop %v598
      %v605 = vmul.f32 1.0, %v604
      %v606 = vrcp.pop %v599
      %v607 = vmul.f32 1.0, %v606
      %v608 = vmul.f32 %v580, %v601
      %v609 = vmul.f32 %v581, %v603
      %v610 = vmul.f32 %v582, %v605
      %v611 = vmul.f32 %v583, %v607
      %v612 = vadd.f32 %v608, %v560
      %v613 = vadd.f32 %v609, %v566
      %v614 = vadd.f32 %v610, %v572
      %v615 = vadd.f32 %v611, %v578
      %616 = vst [vmem:[%s236] sm:$0xff] 0.0
      %617 = vst [vmem:[%s236 + $0x28] sm:$0xff] 0.0
      %618 = vst [vmem:[%s236 + $0x8] sm:$0xff] %v612
      %619 = vst [vmem:[%s236 + $0x10] sm:$0xff] %v613
      %620 = vst [vmem:[%s236 + $0x18] sm:$0xff] %v614
      %621 = vst [vmem:[%s236 + $0x20] sm:$0xff] %v615
      %p622 = scmp.lt.s32.totalorder %s25, 2
      %s623 = scalar_select %p622, %s25, 2
      %p624 = scmp.lt.s32.totalorder %s26, 1
      %s625 = scalar_select %p624, %s26, 1
      %s626 = smul.addr %s625, 6
      %s627 = smul.addr %s623, 12
      %s628 = sadd.s32 %s626, %s627
      %s629 = smul.addr %s628, 8
      %s630 = scalar_lea.vmem %s4, %s629
      // Predicated region
      $region33: #{wavenet_forward.4} parent=31 // pred_check
        %p631 = pneg %p131
      $region34: #{wavenet_forward.4} parent=31 // pred_check_branch
        %633 = sbr.rel (%p631) target = $region36
      $region35: #{wavenet_forward.4} parent=31 // pred_region
        _
      $region36: #{wavenet_forward.4} parent=31 // pred_fallthru
        _
    $region32: #{wavenet_forward.4} parent=5 // pred_fallthru
      _
    %p634 = scmp.le.s32.totalorder 2, %s16
    // Predicated region
    $region37: #{wavenet_forward.4} parent=5 // pred_check
      %p635 = pneg %p634
    $region38: #{wavenet_forward.4} parent=5 // pred_check_branch
      %637 = sbr.rel (%p635) target = $region40
    $region39: #{wavenet_forward.4} parent=5 // pred_region
      %s638 = ssub.s32 %s16, 2
      // Predicated region
      $region41: #{wavenet_forward.4} parent=39 // pred_check
        %p639 = pneg %p137
      $region42: #{wavenet_forward.4} parent=39 // pred_check_branch
        %641 = sbr.rel (%p639) target = $region44
      $region43: #{wavenet_forward.4} parent=39 // pred_region
        %p642 = scmp.lt.s32.totalorder %s27, 2
        %s643 = scalar_select %p642, %s27, 2
        %p644 = scmp.lt.s32.totalorder %s28, 1
        %s645 = scalar_select %p644, %s28, 1
        %s646 = smul.addr %s645, 6
        %s647 = smul.addr %s643, 12
        %s648 = sadd.s32 %s646, %s647
        %s649 = smul.addr %s648, 8
        %s650 = scalar_lea.vmem %s4, %s649
      $region44: #{wavenet_forward.4} parent=39 // pred_fallthru
        _
    $region40: #{wavenet_forward.4} parent=5 // pred_fallthru
      _
  $region6: #{wavenet_forward.4} parent=0 // loop_footer
    %s20 = sadd.s32 1, %s16
  $region7: #{wavenet_forward.4} parent=0 // loop_footer_branch
    %15 = sbr.rel target = $region3
  $region8: #{wavenet_forward.4} parent=0 // loop_exit
    _

// kernel: wavenet_forward.5
$region0: #{wavenet_forward.5}
  #allocation0 [shape = 'u32[]', space=smem, size = 0x4, offset = 0x4, fixed_abs, tag = 'smem constant byte address 0x4 - core index']
  #allocation1 [shape = 'u32[144,128]{1,0:T(1,128)}', space=vmem, size = 0x12000, scoped, tag = 'internal scratch']
  #allocation2 [shape = 'f32[32,128]{1,0:T(8,128)}', space=vmem, size = 0x4000, scoped, tag = 'scratch operand']
  #allocation3 [shape = 's32[1]{0}', space=sflag, size = 0x4, scoped, tag = 'scoped memory for wavenet_forward.5']
  #allocation4 [shape = 'u8[2048]{0}', space=smem, size = 0x800, scoped, tag = 'prefetched SMEM operand 0']
  %s0 = inlined_call_operand.vmem [shape: s32[3,3], index: 0, kind: input, shape index: {}]
  %s1 = inlined_call_operand.vmem [shape: f32[3,2,48,128], index: 1, kind: input, shape index: {}]
  %s2 = inlined_call_operand.vmem [shape: f32[3,512,256], index: 2, kind: input, shape index: {}]
  %s3 = inlined_call_operand.vmem [shape: f32[3,1,256], index: 3, kind: input, shape index: {}]
  %s4 = inlined_call_operand.vmem [shape: f32[3,128,128], index: 4, kind: input, shape index: {}]
  %s5 = inlined_call_operand.vmem [shape: f32[3,1,128], index: 5, kind: input, shape index: {}]
  %s6 = inlined_call_operand.vmem [shape: f32[128,128], index: 6, kind: input, shape index: {}]
  %s7 = inlined_call_operand.vmem [shape: f32[1,128], index: 7, kind: input, shape index: {}]
  %s8 = inlined_call_operand.vmem [shape: f32[2,32,128], index: 8, kind: output, shape index: {}]
  %s9 = sld [smem:[#allocation0]]
  $region69: #{wavenet_forward.5} parent=0
    _
  %s11 = ssub.s32 1, %s9
  %s12 = scalar_select 0, %s11, %s9
  %s13 = sshll.u32 %s0, 4
  %s14 = int_to_ptr.vmem [resolvable:$true] %s13
  %16 = dma.vmem_to_smem %s14, 64, [#allocation4], [#allocation3]
  %17 = dma.done [#allocation3], 64
  %18 = sfence
  loop: start=0, step=1, limit=8
  $region2: #{wavenet_forward.5} parent=0 // loop_pre_header
    _
  $region3: #{wavenet_forward.5} parent=0 // loop_header
    %s20 = sphi 0, %s24
    %p21 = scmp.ge.s32.totalorder %s20, 8
    %s27 = sphi 0, %s39
    %s28 = sphi 0, %s35
    %s29 = sphi 0, %s27
    %s30 = sphi 0, %s28
    %s31 = sphi 0, %s29
    %s32 = sphi 0, %s30
    %s44 = sphi 0, %s46
    %s47 = sphi 0, %s44
    %s48 = sphi 0, %s47
    %s64 = sphi 0, %s48
    %s70 = sphi 0, %s72
    %s73 = sphi 0, %s70
    %s74 = sphi 0, %s73
    %s90 = sphi 0, %s74
    %s96 = sphi 0, %s98
    %s99 = sphi 0, %s96
    %s100 = sphi 0, %s99
    %s116 = sphi 0, %s100
    %s122 = sphi 0, %s124
    %s125 = sphi 0, %s122
    %s126 = sphi 0, %s125
    %s142 = sphi 0, %s126
    %s148 = sphi 0, %s150
    %s151 = sphi 0, %s148
    %s152 = sphi 0, %s151
    %s168 = sphi 0, %s152
    %s172 = sphi 0, %s172
    %s174 = sphi 0, %s172
    %s175 = sphi 0, %s174
    %s189 = sphi 0, %s175
    %s193 = sphi 0, %s193
    %s195 = sphi 0, %s193
    %s196 = sphi 0, %s195
    %s210 = sphi 0, %s196
    %s216 = sphi 0, %s218
    %s219 = sphi 0, %s216
    %s220 = sphi 0, %s219
    %s236 = sphi 0, %s220
  $region4: #{wavenet_forward.5} parent=0 // loop_header_branch
    %23 = sbr.rel (%p21) target = $region8
  $region5: #{wavenet_forward.5} parent=0 // loop_body
    %s25 = ssub.s32 %s20, 1
    %s26 = ssub.s32 %s20, 2
    %s33 = sadd.s32 1, %s28
    %p34 = scmp.ge.s32.totalorder %s33, 3
    %s35 = scalar_select %p34, 0, %s33
    %s36 = sadd.s32 1, %s27
    %s37 = scalar_select %p34, %s36, %s27
    %p38 = scmp.ge.s32.totalorder %s37, 2
    %s39 = scalar_select %p38, 0, %s37
    %s40 = ssub.s32 %s28, %s35
    %s41 = ssub.s32 %s27, %s39
    %s42 = sor.u32 %s40, %s41
    %p43 = scmp.eq.s32.totalorder %s42, 0
    %s45 = sadd.s32 %s44, 1
    %s46 = scalar_select %p43, %s44, %s45
    %p49 = pneg %p43
    %p50 = scmp.eq.s32.totalorder %s20, 5
    %p51 = por %p49, %p50
    %p52 = scmp.ne.s32.totalorder %s44, %s47
    %p53 = scmp.eq.s32.totalorder %s20, 0
    %p54 = por %p52, %p53
    %p55 = scmp.ne.s32.totalorder %s44, %s47
    %p56 = scmp.eq.s32.totalorder %s25, 5
    %p57 = por %p55, %p56
    %p58 = scmp.ne.s32.totalorder %s47, %s48
    %p59 = scmp.eq.s32.totalorder %s25, 0
    %p60 = por %p58, %p59
    %p61 = scmp.ne.s32.totalorder %s47, %s48
    %p62 = scmp.eq.s32.totalorder %s26, 5
    %p63 = por %p61, %p62
    %p65 = scmp.ne.s32.totalorder %s48, %s64
    %p66 = scmp.eq.s32.totalorder %s26, 0
    %p67 = por %p65, %p66
    %s68 = ssub.s32 %s28, %s35
    %p69 = scmp.eq.s32.totalorder %s68, 0
    %s71 = sadd.s32 %s70, 1
    %s72 = scalar_select %p69, %s70, %s71
    %p75 = pneg %p69
    %p76 = scmp.eq.s32.totalorder %s20, 5
    %p77 = por %p75, %p76
    %p78 = scmp.ne.s32.totalorder %s70, %s73
    %p79 = scmp.eq.s32.totalorder %s20, 0
    %p80 = por %p78, %p79
    %p81 = scmp.ne.s32.totalorder %s70, %s73
    %p82 = scmp.eq.s32.totalorder %s25, 5
    %p83 = por %p81, %p82
    %p84 = scmp.ne.s32.totalorder %s73, %s74
    %p85 = scmp.eq.s32.totalorder %s25, 0
    %p86 = por %p84, %p85
    %p87 = scmp.ne.s32.totalorder %s73, %s74
    %p88 = scmp.eq.s32.totalorder %s26, 5
    %p89 = por %p87, %p88
    %p91 = scmp.ne.s32.totalorder %s74, %s90
    %p92 = scmp.eq.s32.totalorder %s26, 0
    %p93 = por %p91, %p92
    %s94 = ssub.s32 %s28, %s35
    %p95 = scmp.eq.s32.totalorder %s94, 0
    %s97 = sadd.s32 %s96, 1
    %s98 = scalar_select %p95, %s96, %s97
    %p101 = pneg %p95
    %p102 = scmp.eq.s32.totalorder %s20, 5
    %p103 = por %p101, %p102
    %p104 = scmp.ne.s32.totalorder %s96, %s99
    %p105 = scmp.eq.s32.totalorder %s20, 0
    %p106 = por %p104, %p105
    %p107 = scmp.ne.s32.totalorder %s96, %s99
    %p108 = scmp.eq.s32.totalorder %s25, 5
    %p109 = por %p107, %p108
    %p110 = scmp.ne.s32.totalorder %s99, %s100
    %p111 = scmp.eq.s32.totalorder %s25, 0
    %p112 = por %p110, %p111
    %p113 = scmp.ne.s32.totalorder %s99, %s100
    %p114 = scmp.eq.s32.totalorder %s26, 5
    %p115 = por %p113, %p114
    %p117 = scmp.ne.s32.totalorder %s100, %s116
    %p118 = scmp.eq.s32.totalorder %s26, 0
    %p119 = por %p117, %p118
    %s120 = ssub.s32 %s28, %s35
    %p121 = scmp.eq.s32.totalorder %s120, 0
    %s123 = sadd.s32 %s122, 1
    %s124 = scalar_select %p121, %s122, %s123
    %p127 = pneg %p121
    %p128 = scmp.eq.s32.totalorder %s20, 5
    %p129 = por %p127, %p128
    %p130 = scmp.ne.s32.totalorder %s122, %s125
    %p131 = scmp.eq.s32.totalorder %s20, 0
    %p132 = por %p130, %p131
    %p133 = scmp.ne.s32.totalorder %s122, %s125
    %p134 = scmp.eq.s32.totalorder %s25, 5
    %p135 = por %p133, %p134
    %p136 = scmp.ne.s32.totalorder %s125, %s126
    %p137 = scmp.eq.s32.totalorder %s25, 0
    %p138 = por %p136, %p137
    %p139 = scmp.ne.s32.totalorder %s125, %s126
    %p140 = scmp.eq.s32.totalorder %s26, 5
    %p141 = por %p139, %p140
    %p143 = scmp.ne.s32.totalorder %s126, %s142
    %p144 = scmp.eq.s32.totalorder %s26, 0
    %p145 = por %p143, %p144
    %s146 = ssub.s32 %s28, %s35
    %p147 = scmp.eq.s32.totalorder %s146, 0
    %s149 = sadd.s32 %s148, 1
    %s150 = scalar_select %p147, %s148, %s149
    %p153 = pneg %p147
    %p154 = scmp.eq.s32.totalorder %s20, 5
    %p155 = por %p153, %p154
    %p156 = scmp.ne.s32.totalorder %s148, %s151
    %p157 = scmp.eq.s32.totalorder %s20, 0
    %p158 = por %p156, %p157
    %p159 = scmp.ne.s32.totalorder %s148, %s151
    %p160 = scmp.eq.s32.totalorder %s25, 5
    %p161 = por %p159, %p160
    %p162 = scmp.ne.s32.totalorder %s151, %s152
    %p163 = scmp.eq.s32.totalorder %s25, 0
    %p164 = por %p162, %p163
    %p165 = scmp.ne.s32.totalorder %s151, %s152
    %p166 = scmp.eq.s32.totalorder %s26, 5
    %p167 = por %p165, %p166
    %p169 = scmp.ne.s32.totalorder %s152, %s168
    %p170 = scmp.eq.s32.totalorder %s26, 0
    %p171 = por %p169, %p170
    %s173 = sadd.s32 %s172, 1
    %p176 = scmp.eq.s32.totalorder %s20, 5
    %p177 = scmp.ne.s32.totalorder %s172, %s174
    %p178 = scmp.eq.s32.totalorder %s20, 0
    %p179 = por %p177, %p178
    %p180 = scmp.ne.s32.totalorder %s172, %s174
    %p181 = scmp.eq.s32.totalorder %s25, 5
    %p182 = por %p180, %p181
    %p183 = scmp.ne.s32.totalorder %s174, %s175
    %p184 = scmp.eq.s32.totalorder %s25, 0
    %p185 = por %p183, %p184
    %p186 = scmp.ne.s32.totalorder %s174, %s175
    %p187 = scmp.eq.s32.totalorder %s26, 5
    %p188 = por %p186, %p187
    %p190 = scmp.ne.s32.totalorder %s175, %s189
    %p191 = scmp.eq.s32.totalorder %s26, 0
    %p192 = por %p190, %p191
    %s194 = sadd.s32 %s193, 1
    %p197 = scmp.eq.s32.totalorder %s20, 5
    %p198 = scmp.ne.s32.totalorder %s193, %s195
    %p199 = scmp.eq.s32.totalorder %s20, 0
    %p200 = por %p198, %p199
    %p201 = scmp.ne.s32.totalorder %s193, %s195
    %p202 = scmp.eq.s32.totalorder %s25, 5
    %p203 = por %p201, %p202
    %p204 = scmp.ne.s32.totalorder %s195, %s196
    %p205 = scmp.eq.s32.totalorder %s25, 0
    %p206 = por %p204, %p205
    %p207 = scmp.ne.s32.totalorder %s195, %s196
    %p208 = scmp.eq.s32.totalorder %s26, 5
    %p209 = por %p207, %p208
    %p211 = scmp.ne.s32.totalorder %s196, %s210
    %p212 = scmp.eq.s32.totalorder %s26, 0
    %p213 = por %p211, %p212
    %s214 = ssub.s32 %s27, %s39
    %p215 = scmp.eq.s32.totalorder %s214, 0
    %s217 = sadd.s32 %s216, 1
    %s218 = scalar_select %p215, %s216, %s217
    %p221 = pneg %p215
    %p222 = scmp.eq.s32.totalorder %s20, 5
    %p223 = por %p221, %p222
    %p224 = scmp.ne.s32.totalorder %s216, %s219
    %p225 = scmp.eq.s32.totalorder %s20, 0
    %p226 = por %p224, %p225
    %p227 = scmp.ne.s32.totalorder %s216, %s219
    %p228 = scmp.eq.s32.totalorder %s25, 5
    %p229 = por %p227, %p228
    %p230 = scmp.ne.s32.totalorder %s219, %s220
    %p231 = scmp.eq.s32.totalorder %s25, 0
    %p232 = por %p230, %p231
    %p233 = scmp.ne.s32.totalorder %s219, %s220
    %p234 = scmp.eq.s32.totalorder %s26, 5
    %p235 = por %p233, %p234
    %p237 = scmp.ne.s32.totalorder %s220, %s236
    %p238 = scmp.eq.s32.totalorder %s26, 0
    %p239 = por %p237, %p238
    %p240 = scmp.le.s32.totalorder 1, %s20
    %p241 = scmp.lt.s32.totalorder %s20, 7
    %p242 = pnand %p240, %p241
    %p243 = pneg %p242
    // Predicated region
    $region9: #{wavenet_forward.5} parent=5 // pred_check
      _
    $region10: #{wavenet_forward.5} parent=5 // pred_check_branch
      %245 = sbr.rel (%p242) target = $region12
    $region11: #{wavenet_forward.5} parent=5 // pred_region
      %s246 = ssub.s32 %s20, 1
      // Predicated region
      $region13: #{wavenet_forward.5} parent=11 // pred_check
        %p247 = pneg %p185
      $region14: #{wavenet_forward.5} parent=11 // pred_check_branch
        %249 = sbr.rel (%p247) target = $region16
      $region15: #{wavenet_forward.5} parent=11 // pred_region
        _
      $region16: #{wavenet_forward.5} parent=11 // pred_fallthru
        _
      // Predicated region
      $region17: #{wavenet_forward.5} parent=11 // pred_check
        %p250 = pneg %p206
      $region18: #{wavenet_forward.5} parent=11 // pred_check_branch
        %252 = sbr.rel (%p250) target = $region20
      $region19: #{wavenet_forward.5} parent=11 // pred_region
        _
      $region20: #{wavenet_forward.5} parent=11 // pred_fallthru
        _
    $region12: #{wavenet_forward.5} parent=5 // pred_fallthru
      _
    %p253 = scmp.lt.s32.totalorder %s20, 6
    // Predicated region
    $region21: #{wavenet_forward.5} parent=5 // pred_check
      %p254 = pneg %p253
    $region22: #{wavenet_forward.5} parent=5 // pred_check_branch
      %256 = sbr.rel (%p254) target = $region24
    $region23: #{wavenet_forward.5} parent=5 // pred_region
      // Predicated region
      $region25: #{wavenet_forward.5} parent=23 // pred_check
        %p257 = pneg %p54
      $region26: #{wavenet_forward.5} parent=23 // pred_check_branch
        %259 = sbr.rel (%p257) target = $region28
      $region27: #{wavenet_forward.5} parent=23 // pred_region
        %p260 = scmp.lt.s32.totalorder %s28, 2
        %s261 = scalar_select %p260, %s28, 2
        %p262 = scmp.lt.s32.totalorder %s27, 1
        %s263 = scalar_select %p262, %s27, 1
        %s264 = smul.addr %s263, 6
        %s265 = smul.addr %s261, 12
        %s266 = sadd.s32 %s264, %s265
        %s267 = smul.addr %s266, 8
        %s268 = scalar_lea.vmem %s1, %s267
      $region28: #{wavenet_forward.5} parent=23 // pred_fallthru
        _
      // Predicated region
      $region29: #{wavenet_forward.5} parent=23 // pred_check
        %p269 = pneg %p80
      $region30: #{wavenet_forward.5} parent=23 // pred_check_branch
        %271 = sbr.rel (%p269) target = $region32
      $region31: #{wavenet_forward.5} parent=23 // pred_region
        %p272 = scmp.lt.s32.totalorder %s28, 2
        %s273 = scalar_select %p272, %s28, 2
        %s274 = smul.addr %s273, 128
        %s275 = smul.addr %s274, 8
        %s276 = scalar_lea.vmem %s2, %s275
      $region32: #{wavenet_forward.5} parent=23 // pred_fallthru
        _
      // Predicated region
      $region33: #{wavenet_forward.5} parent=23 // pred_check
        %p277 = pneg %p106
      $region34: #{wavenet_forward.5} parent=23 // pred_check_branch
        %279 = sbr.rel (%p277) target = $region36
      $region35: #{wavenet_forward.5} parent=23 // pred_region
        %p280 = scmp.lt.s32.totalorder %s28, 2
        %s281 = scalar_select %p280, %s28, 2
        %s282 = smul.addr %s281, 2
        %s283 = scalar_lea.vmem %s3, %s282
      $region36: #{wavenet_forward.5} parent=23 // pred_fallthru
        _
      // Predicated region
      $region37: #{wavenet_forward.5} parent=23 // pred_check
        %p284 = pneg %p132
      $region38: #{wavenet_forward.5} parent=23 // pred_check_branch
        %286 = sbr.rel (%p284) target = $region40
      $region39: #{wavenet_forward.5} parent=23 // pred_region
        %p287 = scmp.lt.s32.totalorder %s28, 2
        %s288 = scalar_select %p287, %s28, 2
        %s289 = smul.addr %s288, 16
        %s290 = smul.addr %s289, 8
        %s291 = scalar_lea.vmem %s4, %s290
      $region40: #{wavenet_forward.5} parent=23 // pred_fallthru
        _
      // Predicated region
      $region41: #{wavenet_forward.5} parent=23 // pred_check
        %p292 = pneg %p158
      $region42: #{wavenet_forward.5} parent=23 // pred_check_branch
        %294 = sbr.rel (%p292) target = $region44
      $region43: #{wavenet_forward.5} parent=23 // pred_region
        %p295 = scmp.lt.s32.totalorder %s28, 2
        %s296 = scalar_select %p295, %s28, 2
        %s297 = scalar_lea.vmem %s5, %s296
      $region44: #{wavenet_forward.5} parent=23 // pred_fallthru
        _
    $region24: #{wavenet_forward.5} parent=5 // pred_fallthru
      _
    %p298 = scmp.le.s32.totalorder 1, %s20
    %p299 = scmp.lt.s32.totalorder %s20, 7
    %p300 = pnand %p298, %p299
    %p301 = pneg %p300
    // Predicated region
    $region45: #{wavenet_forward.5} parent=5 // pred_check
      _
    $region46: #{wavenet_forward.5} parent=5 // pred_check_branch
      %303 = sbr.rel (%p300) target = $region48
    $region47: #{wavenet_forward.5} parent=5 // pred_region
      %s304 = ssub.s32 %s20, 1
      %p305 = scmp.lt.s32.totalorder %s30, 2
      %s306 = scalar_select %p305, %s30, 2
      %p307 = scmp.lt.s32.totalorder %s29, 1
      %s308 = scalar_select %p307, %s29, 1
      %s309 = smul.addr %s308, 6
      %s310 = smul.addr %s306, 12
      %s311 = sadd.s32 %s309, %s310
      %s312 = smul.addr %s311, 8
      %s313 = scalar_lea.vmem %s1, %s312
      %p314 = pneg %p60
      %p315 = pneg %p57
      %p316 = scmp.lt.s32.totalorder %s30, 2
      %s317 = scalar_select %p316, %s30, 2
      %s318 = smul.addr %s317, 128
      %s319 = smul.addr %s318, 8
      %s320 = scalar_lea.vmem %s2, %s319
      %p321 = pneg %p86
      %p322 = pneg %p83
      %p323 = scmp.lt.s32.totalorder %s30, 2
      %s324 = scalar_select %p323, %s30, 2
      %s325 = smul.addr %s324, 2
      %s326 = scalar_lea.vmem %s3, %s325
      %p327 = pneg %p112
      %p328 = pneg %p109
      %p329 = scmp.lt.s32.totalorder %s30, 2
      %s330 = scalar_select %p329, %s30, 2
      %s331 = smul.addr %s330, 16
      %s332 = smul.addr %s331, 8
      %s333 = scalar_lea.vmem %s4, %s332
      %p334 = pneg %p138
      %p335 = pneg %p135
      %p336 = scmp.lt.s32.totalorder %s30, 2
      %s337 = scalar_select %p336, %s30, 2
      %s338 = scalar_lea.vmem %s5, %s337
      %p339 = pneg %p164
      %p340 = pneg %p161
      %p341 = pneg %p185
      %p342 = pneg %p182
      %p343 = pneg %p206
      %p344 = pneg %p203
      %p345 = pneg %p232
      %p346 = pneg %p229
      %p347 = scmp.lt.s32.totalorder %s29, 1
      %s348 = scalar_select %p347, %s29, 1
      %s349 = smul.addr %s348, 4
      %s350 = smul.addr %s349, 8
      %s351 = scalar_lea.vmem %s8, %s350
      %p352 = scmp.lt.s32.totalorder %s30, 2
      %s353 = scalar_select %p352, %s30, 2
      %p354 = scmp.lt.s32.totalorder %s29, 1
      %s355 = scalar_select %p354, %s29, 1
      %s356 = smul.addr %s355, 6
      %s357 = smul.addr %s353, 12
      %s358 = sadd.s32 %s356, %s357
      %s359 = smul.addr %s358, 8
      %s360 = scalar_lea.vmem %s1, %s359
      %p361 = scmp.lt.s32.totalorder %s30, 2
      %s362 = scalar_select %p361, %s30, 2
      %s363 = smul.addr %s362, 128
      %s364 = smul.addr %s363, 8
      %s365 = scalar_lea.vmem %s2, %s364
      %p366 = scmp.lt.s32.totalorder %s30, 2
      %s367 = scalar_select %p366, %s30, 2
      %s368 = smul.addr %s367, 2
      %s369 = scalar_lea.vmem %s3, %s368
      %p370 = scmp.lt.s32.totalorder %s30, 2
      %s371 = scalar_select %p370, %s30, 2
      %s372 = smul.addr %s371, 16
      %s373 = smul.addr %s372, 8
      %s374 = scalar_lea.vmem %s4, %s373
      %p375 = scmp.lt.s32.totalorder %s30, 2
      %s376 = scalar_select %p375, %s30, 2
      %s377 = scalar_lea.vmem %s5, %s376
      %p378 = scmp.lt.s32.totalorder %s29, 1
      %s379 = scalar_select %p378, %s29, 1
      %s380 = smul.addr %s379, 4
      %s381 = smul.addr %s380, 8
      %s382 = scalar_lea.vmem %s8, %s381
      %p383 = scmp.eq.s32.totalorder %s30, 0
      // Predicated region
      $region49: #{wavenet_forward.5} parent=47 // pred_check
        %p384 = pneg %p383
      $region50: #{wavenet_forward.5} parent=47 // pred_check_branch
        %386 = sbr.rel (%p384) target = $region52
      $region51: #{wavenet_forward.5} parent=47 // pred_region
        %387 = vst [vmem:[#allocation2] sm:$0xff] 0.0
        %388 = vst [vmem:[#allocation2 + $0x8] sm:$0xff] 0.0
        %389 = vst [vmem:[#allocation2 + $0x10] sm:$0xff] 0.0
        %390 = vst [vmem:[#allocation2 + $0x18] sm:$0xff] 0.0
      $region52: #{wavenet_forward.5} parent=47 // pred_fallthru
        _
      %s391 = smul.u32 %s30, 128
      %s392 = sld [smem:[#allocation4 + %s391]]
      %s393 = scalar_lea.vmem %s360, %s392
      %v394 = vld [vmem:[%s393] sm:$0xff]
      %v395 = vld [vmem:[%s393 + $0x8] sm:$0xff]
      %v396 = vld [vmem:[%s393 + $0x10] sm:$0xff]
      %v397 = vld [vmem:[%s393 + $0x18] sm:$0xff]
      %s398 = sadd.s32 %s391, 1
      %s399 = sld [smem:[#allocation4 + %s398]]
      %s400 = scalar_lea.vmem %s360, %s399
      %v401 = vld [vmem:[%s400] sm:$0xff]
      %v402 = vld [vmem:[%s400 + $0x8] sm:$0xff]
      %v403 = vld [vmem:[%s400 + $0x10] sm:$0xff]
      %v404 = vld [vmem:[%s400 + $0x18] sm:$0xff]
      %s405 = sadd.s32 %s391, 2
      %s406 = sld [smem:[#allocation4 + %s405]]
      %s407 = scalar_lea.vmem %s360, %s406
      %v408 = vld [vmem:[%s407] sm:$0xff]
      %v409 = vld [vmem:[%s407 + $0x8] sm:$0xff]
      %v410 = vld [vmem:[%s407 + $0x10] sm:$0xff]
      %v411 = vld [vmem:[%s407 + $0x18] sm:$0xff]
      %v412 = vld [vmem:[%s360 + $0x8] sm:$0xff]
      %v413 = vld [vmem:[%s360 + $0x10] sm:$0xff]
      %v414 = vld [vmem:[%s360 + $0x18] sm:$0xff]
      %v415 = vld [vmem:[%s360 + $0x20] sm:$0xff]
      %v416 = vld [vmem:[%s365] sm:$0xff]
      %v417 = vld [vmem:[%s365 + $0x8] sm:$0xff]
      %v418 = vld [vmem:[%s365 + $0x10] sm:$0xff]
      %v419 = vld [vmem:[%s365 + $0x18] sm:$0xff]
      %v420 = vld [vmem:[%s365 + $0x20] sm:$0xff]
      %v421 = vld [vmem:[%s365 + $0x28] sm:$0xff]
      %v422 = vld [vmem:[%s365 + $0x30] sm:$0xff]
      %v423 = vld [vmem:[%s365 + $0x38] sm:$0xff]
      %v424 = vld [vmem:[%s365 + $0x40] sm:$0xff]
      %v425 = vld [vmem:[%s365 + $0x48] sm:$0xff]
      %v426 = vld [vmem:[%s365 + $0x50] sm:$0xff]
      %v427 = vld [vmem:[%s365 + $0x58] sm:$0xff]
      %v428 = vld [vmem:[%s365 + $0x60] sm:$0xff]
      %v429 = vld [vmem:[%s365 + $0x68] sm:$0xff]
      %v430 = vld [vmem:[%s365 + $0x70] sm:$0xff]
      %v431 = vld [vmem:[%s365 + $0x78] sm:$0xff]
      %v432 = vld [vmem:[%s365 + $0x80] sm:$0xff]
      %v433 = vld [vmem:[%s365 + $0x88] sm:$0xff]
      %v434 = vld [vmem:[%s365 + $0x90] sm:$0xff]
      %v435 = vld [vmem:[%s365 + $0x98] sm:$0xff]
      %v436 = vld [vmem:[%s365 + $0xa0] sm:$0xff]
      %v437 = vld [vmem:[%s365 + $0xa8] sm:$0xff]
      %v438 = vld [vmem:[%s365 + $0xb0] sm:$0xff]
      %v439 = vld [vmem:[%s365 + $0xb8] sm:$0xff]
      %v440 = vld [vmem:[%s365 + $0xc0] sm:$0xff]
      %v441 = vld [vmem:[%s365 + $0xc8] sm:$0xff]
      %v442 = vld [vmem:[%s365 + $0xd0] sm:$0xff]
      %v443 = vld [vmem:[%s365 + $0xd8] sm:$0xff]
      %v444 = vld [vmem:[%s365 + $0xe0] sm:$0xff]
      %v445 = vld [vmem:[%s365 + $0xe8] sm:$0xff]
      %v446 = vld [vmem:[%s365 + $0xf0] sm:$0xff]
      %v447 = vld [vmem:[%s365 + $0xf8] sm:$0xff]
      %v448 = vld [vmem:[%s365 + $0x100] sm:$0xff]
      %v449 = vld [vmem:[%s365 + $0x108] sm:$0xff]
      %v450 = vld [vmem:[%s365 + $0x110] sm:$0xff]
      %v451 = vld [vmem:[%s365 + $0x118] sm:$0xff]
      %v452 = vld [vmem:[%s365 + $0x120] sm:$0xff]
      %v453 = vld [vmem:[%s365 + $0x128] sm:$0xff]
      %v454 = vld [vmem:[%s365 + $0x130] sm:$0xff]
      %v455 = vld [vmem:[%s365 + $0x138] sm:$0xff]
      %v456 = vld [vmem:[%s365 + $0x140] sm:$0xff]
      %v457 = vld [vmem:[%s365 + $0x148] sm:$0xff]
      %v458 = vld [vmem:[%s365 + $0x150] sm:$0xff]
      %v459 = vld [vmem:[%s365 + $0x158] sm:$0xff]
      %v460 = vld [vmem:[%s365 + $0x160] sm:$0xff]
      %v461 = vld [vmem:[%s365 + $0x168] sm:$0xff]
      %v462 = vld [vmem:[%s365 + $0x170] sm:$0xff]
      %v463 = vld [vmem:[%s365 + $0x178] sm:$0xff]
      %v464 = vld [vmem:[%s365 + $0x180] sm:$0xff]
      %v465 = vld [vmem:[%s365 + $0x188] sm:$0xff]
      %v466 = vld [vmem:[%s365 + $0x190] sm:$0xff]
      %v467 = vld [vmem:[%s365 + $0x198] sm:$0xff]
      %v468 = vld [vmem:[%s365 + $0x1a0] sm:$0xff]
      %v469 = vld [vmem:[%s365 + $0x1a8] sm:$0xff]
      %v470 = vld [vmem:[%s365 + $0x1b0] sm:$0xff]
      %v471 = vld [vmem:[%s365 + $0x1b8] sm:$0xff]
      %v472 = vld [vmem:[%s365 + $0x1c0] sm:$0xff]
      %v473 = vld [vmem:[%s365 + $0x1c8] sm:$0xff]
      %v474 = vld [vmem:[%s365 + $0x1d0] sm:$0xff]
      %v475 = vld [vmem:[%s365 + $0x1d8] sm:$0xff]
      %v476 = vld [vmem:[%s365 + $0x1e0] sm:$0xff]
      %v477 = vld [vmem:[%s365 + $0x1e8] sm:$0xff]
      %v478 = vld [vmem:[%s365 + $0x1f0] sm:$0xff]
      %v479 = vld [vmem:[%s365 + $0x1f8] sm:$0xff]
      %v480 = vld [vmem:[%s365 + $0x200] sm:$0xff]
      %v481 = vld [vmem:[%s365 + $0x208] sm:$0xff]
      %v482 = vld [vmem:[%s365 + $0x210] sm:$0xff]
      %v483 = vld [vmem:[%s365 + $0x218] sm:$0xff]
      %v484 = vld [vmem:[%s365 + $0x220] sm:$0xff]
      %v485 = vld [vmem:[%s365 + $0x228] sm:$0xff]
      %v486 = vld [vmem:[%s365 + $0x230] sm:$0xff]
      %v487 = vld [vmem:[%s365 + $0x238] sm:$0xff]
      %v488 = vld [vmem:[%s365 + $0x240] sm:$0xff]
      %v489 = vld [vmem:[%s365 + $0x248] sm:$0xff]
      %v490 = vld [vmem:[%s365 + $0x250] sm:$0xff]
      %v491 = vld [vmem:[%s365 + $0x258] sm:$0xff]
      %v492 = vld [vmem:[%s365 + $0x260] sm:$0xff]
      %v493 = vld [vmem:[%s365 + $0x268] sm:$0xff]
      %v494 = vld [vmem:[%s365 + $0x270] sm:$0xff]
      %v495 = vld [vmem:[%s365 + $0x278] sm:$0xff]
      %v496 = vld [vmem:[%s365 + $0x280] sm:$0xff]
      %v497 = vld [vmem:[%s365 + $0x288] sm:$0xff]
      %v498 = vld [vmem:[%s365 + $0x290] sm:$0xff]
      %v499 = vld [vmem:[%s365 + $0x298] sm:$0xff]
      %v500 = vld [vmem:[%s365 + $0x2a0] sm:$0xff]
      %v501 = vld [vmem:[%s365 + $0x2a8] sm:$0xff]
      %v502 = vld [vmem:[%s365 + $0x2b0] sm:$0xff]
      %v503 = vld [vmem:[%s365 + $0x2b8] sm:$0xff]
      %v504 = vld [vmem:[%s365 + $0x2c0] sm:$0xff]
      %v505 = vld [vmem:[%s365 + $0x2c8] sm:$0xff]
      %v506 = vld [vmem:[%s365 + $0x2d0] sm:$0xff]
      %v507 = vld [vmem:[%s365 + $0x2d8] sm:$0xff]
      %v508 = vld [vmem:[%s365 + $0x2e0] sm:$0xff]
      %v509 = vld [vmem:[%s365 + $0x2e8] sm:$0xff]
      %v510 = vld [vmem:[%s365 + $0x2f0] sm:$0xff]
      %v511 = vld [vmem:[%s365 + $0x2f8] sm:$0xff]
      %v512 = vld [vmem:[%s365 + $0x300] sm:$0xff]
      %v513 = vld [vmem:[%s365 + $0x308] sm:$0xff]
      %v514 = vld [vmem:[%s365 + $0x310] sm:$0xff]
      %v515 = vld [vmem:[%s365 + $0x318] sm:$0xff]
      %v516 = vld [vmem:[%s365 + $0x320] sm:$0xff]
      %v517 = vld [vmem:[%s365 + $0x328] sm:$0xff]
      %v518 = vld [vmem:[%s365 + $0x330] sm:$0xff]
      %v519 = vld [vmem:[%s365 + $0x338] sm:$0xff]
      %v520 = vld [vmem:[%s365 + $0x340] sm:$0xff]
      %v521 = vld [vmem:[%s365 + $0x348] sm:$0xff]
      %v522 = vld [vmem:[%s365 + $0x350] sm:$0xff]
      %v523 = vld [vmem:[%s365 + $0x358] sm:$0xff]
      %v524 = vld [vmem:[%s365 + $0x360] sm:$0xff]
      %v525 = vld [vmem:[%s365 + $0x368] sm:$0xff]
      %v526 = vld [vmem:[%s365 + $0x370] sm:$0xff]
      %v527 = vld [vmem:[%s365 + $0x378] sm:$0xff]
      %v528 = vld [vmem:[%s365 + $0x380] sm:$0xff]
      %v529 = vld [vmem:[%s365 + $0x388] sm:$0xff]
      %v530 = vld [vmem:[%s365 + $0x390] sm:$0xff]
      %v531 = vld [vmem:[%s365 + $0x398] sm:$0xff]
      %v532 = vld [vmem:[%s365 + $0x3a0] sm:$0xff]
      %v533 = vld [vmem:[%s365 + $0x3a8] sm:$0xff]
      %v534 = vld [vmem:[%s365 + $0x3b0] sm:$0xff]
      %v535 = vld [vmem:[%s365 + $0x3b8] sm:$0xff]
      %v536 = vld [vmem:[%s365 + $0x3c0] sm:$0xff]
      %v537 = vld [vmem:[%s365 + $0x3c8] sm:$0xff]
      %v538 = vld [vmem:[%s365 + $0x3d0] sm:$0xff]
      %v539 = vld [vmem:[%s365 + $0x3d8] sm:$0xff]
      %v540 = vld [vmem:[%s365 + $0x3e0] sm:$0xff]
      %v541 = vld [vmem:[%s365 + $0x3e8] sm:$0xff]
      %v542 = vld [vmem:[%s365 + $0x3f0] sm:$0xff]
      %v543 = vld [vmem:[%s365 + $0x3f8] sm:$0xff]
      %v544 = vld [vmem:[%s369] sm:$0x3]
      %v546 = vlaneseq
      %v547 = vshrl.u32 %v546, 7
      %v548 = vsub.s32 0, %v547
      %v549 = vrot.slane %v544, %v548
      %v550 = vlaneseq
      %v551 = vshrl.u32 %v550, 7
      %v552 = vsub.s32 1, %v551
      %v553 = vrot.slane %v544, %v552
      %556 = vmatprep.subr.mxu0 %v417
      %557 = vmatpush1.msra.mxu0 %v416
      %558 = vmatprep.subr.mxu0 %v419
      %559 = vmatpush1.msra.mxu0 %v418
      %560 = vmatprep.subr.mxu0 %v421
      %561 = vmatpush1.msra.mxu0 %v420
      %562 = vmatprep.subr.mxu0 %v423
      %563 = vmatpush1.msra.mxu0 %v422
      %564 = vmatprep.subr.mxu0 %v425
      %565 = vmatpush1.msra.mxu0 %v424
      %566 = vmatprep.subr.mxu0 %v427
      %567 = vmatpush1.msra.mxu0 %v426
      %568 = vmatprep.subr.mxu0 %v429
      %569 = vmatpush1.msra.mxu0 %v428
      %570 = vmatprep.subr.mxu0 %v431
      %571 = vmatpush1.msra.mxu0 %v430
      %572 = vmatprep.subr.mxu0 %v433
      %573 = vmatpush1.msra.mxu0 %v432
      %574 = vmatprep.subr.mxu0 %v435
      %575 = vmatpush1.msra.mxu0 %v434
      %576 = vmatprep.subr.mxu0 %v437
      %577 = vmatpush1.msra.mxu0 %v436
      %578 = vmatprep.subr.mxu0 %v439
      %579 = vmatpush1.msra.mxu0 %v438
      %580 = vmatprep.subr.mxu0 %v441
      %581 = vmatpush1.msra.mxu0 %v440
      %582 = vmatprep.subr.mxu0 %v443
      %583 = vmatpush1.msra.mxu0 %v442
      %584 = vmatprep.subr.mxu0 %v445
      %585 = vmatpush1.msra.mxu0 %v444
      %586 = vmatprep.subr.mxu0 %v447
      %587 = vmatpush1.msra.mxu0 %v446
      %588 = vmatprep.subr.mxu0 %v449
      %589 = vmatpush1.msra.mxu0 %v448
      %590 = vmatprep.subr.mxu0 %v451
      %591 = vmatpush1.msra.mxu0 %v450
      %592 = vmatprep.subr.mxu0 %v453
      %593 = vmatpush1.msra.mxu0 %v452
      %594 = vmatprep.subr.mxu0 %v455
      %595 = vmatpush1.msra.mxu0 %v454
      %596 = vmatprep.subr.mxu0 %v457
      %597 = vmatpush1.msra.mxu0 %v456
      %598 = vmatprep.subr.mxu0 %v459
      %599 = vmatpush1.msra.mxu0 %v458
      %600 = vmatprep.subr.mxu0 %v461
      %601 = vmatpush1.msra.mxu0 %v460
      %602 = vmatprep.subr.mxu0 %v463
      %603 = vmatpush1.msra.mxu0 %v462
      %604 = vmatprep.subr.mxu0 %v465
      %605 = vmatpush1.msra.mxu0 %v464
      %606 = vmatprep.subr.mxu0 %v467
      %607 = vmatpush1.msra.mxu0 %v466
      %608 = vmatprep.subr.mxu0 %v469
      %609 = vmatpush1.msra.mxu0 %v468
      %610 = vmatprep.subr.mxu0 %v471
      %611 = vmatpush1.msra.mxu0 %v470
      %612 = vmatprep.subr.mxu0 %v473
      %613 = vmatpush1.msra.mxu0 %v472
      %614 = vmatprep.subr.mxu0 %v475
      %615 = vmatpush1.msra.mxu0 %v474
      %616 = vmatprep.subr.mxu0 %v477
      %617 = vmatpush1.msra.mxu0 %v476
      %618 = vmatprep.subr.mxu0 %v479
      %619 = vmatpush1.msra.mxu0 %v478
      %620 = vmatprep.mubr.f32.mxu0 %v401
      %621 = vmatmul.mubr.f32.gmra.mrb[0].mxu0 %v394
      %v622 = vpop.f32.mrb[0].mxu0
      %v623 = vadd.f32 %v549, %v622
      %v624 = vpop.f32.mrb[0].mxu0
      %v625 = vadd.f32 %v553, %v624
      %626 = vmatprep.mubr.f32.mxu0 %v402
      %627 = vmatmul.mubr.f32.gmra.mrb[0].mxu0 %v395
      %v628 = vpop.f32.mrb[0].mxu0
      %v629 = vadd.f32 %v549, %v628
      %v630 = vpop.f32.mrb[0].mxu0
      %v631 = vadd.f32 %v553, %v630
      %632 = vmatprep.mubr.f32.mxu0 %v403
      %633 = vmatmul.mubr.f32.gmra.mrb[0].mxu0 %v396
      %v634 = vpop.f32.mrb[0].mxu0
      %v635 = vadd.f32 %v549, %v634
      %v636 = vpop.f32.mrb[0].mxu0
      %v637 = vadd.f32 %v553, %v636
      %638 = vmatprep.mubr.f32.mxu0 %v404
      %639 = vmatmul.mubr.f32.gmra.mrb[0].mxu0 %v397
      %v640 = vpop.f32.mrb[0].mxu0
      %v641 = vadd.f32 %v549, %v640
      %v642 = vpop.f32.mrb[0].mxu0
      %v643 = vadd.f32 %v553, %v642
      %644 = vdwg.mxu0
      %645 = vmatprep.subr.mxu0 %v481
      %646 = vmatpush1.msra.mxu0 %v480
      %647 = vmatprep.subr.mxu0 %v483
      %648 = vmatpush1.msra.mxu0 %v482
      %649 = vmatprep.subr.mxu0 %v485
      %650 = vmatpush1.msra.mxu0 %v484
      %651 = vmatprep.subr.mxu0 %v487
      %652 = vmatpush1.msra.mxu0 %v486
      %653 = vmatprep.subr.mxu0 %v489
      %654 = vmatpush1.msra.mxu0 %v488
      %655 = vmatprep.subr.mxu0 %v491
      %656 = vmatpush1.msra.mxu0 %v490
      %657 = vmatprep.subr.mxu0 %v493
      %658 = vmatpush1.msra.mxu0 %v492
      %659 = vmatprep.subr.mxu0 %v495
      %660 = vmatpush1.msra.mxu0 %v494
      %661 = vmatprep.subr.mxu0 %v497
      %662 = vmatpush1.msra.mxu0 %v496
      %663 = vmatprep.subr.mxu0 %v499
      %664 = vmatpush1.msra.mxu0 %v498
      %665 = vmatprep.subr.mxu0 %v501
      %666 = vmatpush1.msra.mxu0 %v500
      %667 = vmatprep.subr.mxu0 %v503
      %668 = vmatpush1.msra.mxu0 %v502
      %669 = vmatprep.subr.mxu0 %v505
      %670 = vmatpush1.msra.mxu0 %v504
      %671 = vmatprep.subr.mxu0 %v507
      %672 = vmatpush1.msra.mxu0 %v506
      %673 = vmatprep.subr.mxu0 %v509
      %674 = vmatpush1.msra.mxu0 %v508
      %675 = vmatprep.subr.mxu0 %v511
      %676 = vmatpush1.msra.mxu0 %v510
      %677 = vmatprep.subr.mxu0 %v513
      %678 = vmatpush1.msra.mxu0 %v512
      %679 = vmatprep.subr.mxu0 %v515
      %680 = vmatpush1.msra.mxu0 %v514
      %681 = vmatprep.subr.mxu0 %v517
      %682 = vmatpush1.msra.mxu0 %v516
      %683 = vmatprep.subr.mxu0 %v519
      %684 = vmatpush1.msra.mxu0 %v518
      %685 = vmatprep.subr.mxu0 %v521
      %686 = vmatpush1.msra.mxu0 %v520
      %687 = vmatprep.subr.mxu0 %v523
      %688 = vmatpush1.msra.mxu0 %v522
      %689 = vmatprep.subr.mxu0 %v525
      %690 = vmatpush1.msra.mxu0 %v524
      %691 = vmatprep.subr.mxu0 %v527
      %692 = vmatpush1.msra.mxu0 %v526
      %693 = vmatprep.subr.mxu0 %v529
      %694 = vmatpush1.msra.mxu0 %v528
      %695 = vmatprep.subr.mxu0 %v531
      %696 = vmatpush1.msra.mxu0 %v530
      %697 = vmatprep.subr.mxu0 %v533
      %698 = vmatpush1.msra.mxu0 %v532
      %699 = vmatprep.subr.mxu0 %v535
      %700 = vmatpush1.msra.mxu0 %v534
      %701 = vmatprep.subr.mxu0 %v537
      %702 = vmatpush1.msra.mxu0 %v536
      %703 = vmatprep.subr.mxu0 %v539
      %704 = vmatpush1.msra.mxu0 %v538
      %705 = vmatprep.subr.mxu0 %v541
      %706 = vmatpush1.msra.mxu0 %v540
      %707 = vmatprep.subr.mxu0 %v543
      %708 = vmatpush1.msra.mxu0 %v542
      %709 = vmatprep.mubr.f32.mxu0 %v412
      %710 = vmatmul.mubr.f32.gmra.mrb[0].mxu0 %v408
      %v711 = vpop.f32.mrb[0].mxu0
      %v712 = vadd.f32 %v623, %v711
      %v713 = vpop.f32.mrb[0].mxu0
      %v714 = vadd.f32 %v625, %v713
      %715 = vmatprep.mubr.f32.mxu0 %v413
      %716 = vmatmul.mubr.f32.gmra.mrb[0].mxu0 %v409
      %v717 = vpop.f32.mrb[0].mxu0
      %v718 = vadd.f32 %v629, %v717
      %v719 = vpop.f32.mrb[0].mxu0
      %v720 = vadd.f32 %v631, %v719
      %721 = vmatprep.mubr.f32.mxu0 %v414
      %722 = vmatmul.mubr.f32.gmra.mrb[0].mxu0 %v410
      %v723 = vpop.f32.mrb[0].mxu0
      %v724 = vadd.f32 %v635, %v723
      %v725 = vpop.f32.mrb[0].mxu0
      %v726 = vadd.f32 %v637, %v725
      %727 = vmatprep.mubr.f32.mxu0 %v415
      %728 = vmatmul.mubr.f32.gmra.mrb[0].mxu0 %v411
      %v729 = vpop.f32.mrb[0].mxu0
      %v730 = vadd.f32 %v641, %v729
      %v731 = vpop.f32.mrb[0].mxu0
      %v732 = vadd.f32 %v643, %v731
      %733 = vdwg.mxu0
      %v734 = vtanh.pop %v712
      %v735 = vtanh.pop %v718
      %v736 = vtanh.pop %v724
      %v737 = vtanh.pop %v730
      %v738 = vxor.u32 %v712, 2147483648
      %v739 = vxor.u32 %v718, 2147483648
      %v740 = vxor.u32 %v724, 2147483648
      %v741 = vxor.u32 %v730, 2147483648
      %v742 = vmul.f32 %v738, 1.442695
      %v743 = vpow.pop %v742
      %v744 = vmul.f32 %v739, 1.442695
      %v745 = vpow.pop %v744
      %v746 = vmul.f32 %v740, 1.442695
      %v747 = vpow.pop %v746
      %v748 = vmul.f32 %v741, 1.442695
      %v749 = vpow.pop %v748
      %v750 = vadd.f32 %v743, 1.0
      %v751 = vadd.f32 %v745, 1.0
      %v752 = vadd.f32 %v747, 1.0
      %v753 = vadd.f32 %v749, 1.0
      %v754 = vrcp.pop %v750
      %v755 = vmul.f32 1.0, %v754
      %v756 = vrcp.pop %v751
      %v757 = vmul.f32 1.0, %v756
      %v758 = vrcp.pop %v752
      %v759 = vmul.f32 1.0, %v758
      %v760 = vrcp.pop %v753
      %v761 = vmul.f32 1.0, %v760
      %v762 = vmul.f32 %v734, %v755
      %v763 = vmul.f32 %v735, %v757
      %v764 = vmul.f32 %v736, %v759
      %v765 = vmul.f32 %v737, %v761
      %v766 = vadd.f32 %v762, %v714
      %v767 = vadd.f32 %v763, %v720
      %v768 = vadd.f32 %v764, %v726
      %v769 = vadd.f32 %v765, %v732
      %v770 = vld [vmem:[%s374] sm:$0xff]
      %v771 = vld [vmem:[%s374 + $0x8] sm:$0xff]
      %v772 = vld [vmem:[%s374 + $0x10] sm:$0xff]
      %v773 = vld [vmem:[%s374 + $0x18] sm:$0xff]
      %v774 = vld [vmem:[%s374 + $0x20] sm:$0xff]
      %v775 = vld [vmem:[%s374 + $0x28] sm:$0xff]
      %v776 = vld [vmem:[%s374 + $0x30] sm:$0xff]
      %v777 = vld [vmem:[%s374 + $0x38] sm:$0xff]
      %v778 = vld [vmem:[%s374 + $0x40] sm:$0xff]
      %v779 = vld [vmem:[%s374 + $0x48] sm:$0xff]
      %v780 = vld [vmem:[%s374 + $0x50] sm:$0xff]
      %v781 = vld [vmem:[%s374 + $0x58] sm:$0xff]
      %v782 = vld [vmem:[%s374 + $0x60] sm:$0xff]
      %v783 = vld [vmem:[%s374 + $0x68] sm:$0xff]
      %v784 = vld [vmem:[%s374 + $0x70] sm:$0xff]
      %v785 = vld [vmem:[%s374 + $0x78] sm:$0xff]
      %v786 = vld [vmem:[%s377] sm:$0x1]
      %v788 = vlaneseq
      %v789 = vshrl.u32 %v788, 7
      %v790 = vsub.s32 0, %v789
      %v791 = vrot.slane %v786, %v790
      %793 = vmatprep.subr.mxu0 0.0
      %794 = vmatpush1.msra.mxu0 %v770
      %795 = vmatprep.subr.mxu0 0.0
      %796 = vmatpush1.msra.mxu0 %v771
      %797 = vmatprep.subr.mxu0 0.0
      %798 = vmatpush1.msra.mxu0 %v772
      %799 = vmatprep.subr.mxu0 0.0
      %800 = vmatpush1.msra.mxu0 %v773
      %801 = vmatprep.subr.mxu0 0.0
      %802 = vmatpush1.msra.mxu0 %v774
      %803 = vmatprep.subr.mxu0 0.0
      %804 = vmatpush1.msra.mxu0 %v775
      %805 = vmatprep.subr.mxu0 0.0
      %806 = vmatpush1.msra.mxu0 %v776
      %807 = vmatprep.subr.mxu0 0.0
      %808 = vmatpush1.msra.mxu0 %v777
      %809 = vmatprep.subr.mxu0 0.0
      %810 = vmatpush1.msra.mxu0 %v778
      %811 = vmatprep.subr.mxu0 0.0
      %812 = vmatpush1.msra.mxu0 %v779
      %813 = vmatprep.subr.mxu0 0.0
      %814 = vmatpush1.msra.mxu0 %v780
      %815 = vmatprep.subr.mxu0 0.0
      %816 = vmatpush1.msra.mxu0 %v781
      %817 = vmatprep.subr.mxu0 0.0
      %818 = vmatpush1.msra.mxu0 %v782
      %819 = vmatprep.subr.mxu0 0.0
      %820 = vmatpush1.msra.mxu0 %v783
      %821 = vmatprep.subr.mxu0 0.0
      %822 = vmatpush1.msra.mxu0 %v784
      %823 = vmatprep.subr.mxu0 0.0
      %824 = vmatpush1.msra.mxu0 %v785
      %825 = vmatprep.subr.mxu0 0.0
      %826 = vmatpush1.msra.mxu0 0.0
      %827 = vmatprep.subr.mxu0 0.0
      %828 = vmatpush1.msra.mxu0 0.0
      %829 = vmatprep.subr.mxu0 0.0
      %830 = vmatpush1.msra.mxu0 0.0
      %831 = vmatprep.subr.mxu0 0.0
      %832 = vmatpush1.msra.mxu0 0.0
      %833 = vmatprep.subr.mxu0 0.0
      %834 = vmatpush1.msra.mxu0 0.0
      %835 = vmatprep.subr.mxu0 0.0
      %836 = vmatpush1.msra.mxu0 0.0
      %837 = vmatprep.subr.mxu0 0.0
      %838 = vmatpush1.msra.mxu0 0.0
      %839 = vmatprep.subr.mxu0 0.0
      %840 = vmatpush1.msra.mxu0 0.0
      %841 = vmatprep.subr.mxu0 0.0
      %842 = vmatpush1.msra.mxu0 0.0
      %843 = vmatprep.subr.mxu0 0.0
      %844 = vmatpush1.msra.mxu0 0.0
      %845 = vmatprep.subr.mxu0 0.0
      %846 = vmatpush1.msra.mxu0 0.0
      %847 = vmatprep.subr.mxu0 0.0
      %848 = vmatpush1.msra.mxu0 0.0
      %849 = vmatprep.subr.mxu0 0.0
      %850 = vmatpush1.msra.mxu0 0.0
      %851 = vmatprep.subr.mxu0 0.0
      %852 = vmatpush1.msra.mxu0 0.0
      %853 = vmatprep.subr.mxu0 0.0
      %854 = vmatpush1.msra.mxu0 0.0
      %855 = vmatprep.subr.mxu0 0.0
      %856 = vmatpush1.msra.mxu0 0.0
      %857 = vmatprep.mubr.f32.mxu0 0.0
      %858 = vmatmul.mubr.f32.gmra.mrb[0].mxu0 %v766
      %v859 = vpop.f32.mrb[0].mxu0
      %v860 = vadd.f32 %v791, %v859
      %v861 = vpop.f32.mrb[0].mxu0
      %862 = vmatprep.mubr.f32.mxu0 0.0
      %863 = vmatmul.mubr.f32.gmra.mrb[0].mxu0 %v767
      %v864 = vpop.f32.mrb[0].mxu0
      %v865 = vadd.f32 %v791, %v864
      %v866 = vpop.f32.mrb[0].mxu0
      %867 = vmatprep.mubr.f32.mxu0 0.0
      %868 = vmatmul.mubr.f32.gmra.mrb[0].mxu0 %v768
      %v869 = vpop.f32.mrb[0].mxu0
      %v870 = vadd.f32 %v791, %v869
      %v871 = vpop.f32.mrb[0].mxu0
      %872 = vmatprep.mubr.f32.mxu0 0.0
      %873 = vmatmul.mubr.f32.gmra.mrb[0].mxu0 %v769
      %v874 = vpop.f32.mrb[0].mxu0
      %v875 = vadd.f32 %v791, %v874
      %v876 = vpop.f32.mrb[0].mxu0
      %877 = vdwg.mxu0
      %v878 = vld [vmem:[#allocation2] sm:$0xff]
      %v879 = vld [vmem:[#allocation2 + $0x8] sm:$0xff]
      %v880 = vld [vmem:[#allocation2 + $0x10] sm:$0xff]
      %v881 = vld [vmem:[#allocation2 + $0x18] sm:$0xff]
      %v882 = vadd.f32 %v878, %v860
      %v883 = vadd.f32 %v879, %v865
      %v884 = vadd.f32 %v880, %v870
      %v885 = vadd.f32 %v881, %v875
      %886 = vst [vmem:[#allocation2] sm:$0xff] %v882
      %887 = vst [vmem:[#allocation2 + $0x8] sm:$0xff] %v883
      %888 = vst [vmem:[#allocation2 + $0x10] sm:$0xff] %v884
      %889 = vst [vmem:[#allocation2 + $0x18] sm:$0xff] %v885
      %p890 = scmp.eq.s32.totalorder %s30, 2
      // Predicated region
      $region53: #{wavenet_forward.5} parent=47 // pred_check
        %p891 = pneg %p890
      $region54: #{wavenet_forward.5} parent=47 // pred_check_branch
        %893 = sbr.rel (%p891) target = $region56
      $region55: #{wavenet_forward.5} parent=47 // pred_region
        %v894 = vld [vmem:[#allocation2] sm:$0xff]
        %v895 = vld [vmem:[#allocation2 + $0x8] sm:$0xff]
        %v896 = vld [vmem:[#allocation2 + $0x10] sm:$0xff]
        %v897 = vld [vmem:[#allocation2 + $0x18] sm:$0xff]
        %v898 = vld [vmem:[%s6] sm:$0xff]
        %v899 = vld [vmem:[%s6 + $0x8] sm:$0xff]
        %v900 = vld [vmem:[%s6 + $0x10] sm:$0xff]
        %v901 = vld [vmem:[%s6 + $0x18] sm:$0xff]
        %v902 = vld [vmem:[%s6 + $0x20] sm:$0xff]
        %v903 = vld [vmem:[%s6 + $0x28] sm:$0xff]
        %v904 = vld [vmem:[%s6 + $0x30] sm:$0xff]
        %v905 = vld [vmem:[%s6 + $0x38] sm:$0xff]
        %v906 = vld [vmem:[%s6 + $0x40] sm:$0xff]
        %v907 = vld [vmem:[%s6 + $0x48] sm:$0xff]
        %v908 = vld [vmem:[%s6 + $0x50] sm:$0xff]
        %v909 = vld [vmem:[%s6 + $0x58] sm:$0xff]
        %v910 = vld [vmem:[%s6 + $0x60] sm:$0xff]
        %v911 = vld [vmem:[%s6 + $0x68] sm:$0xff]
        %v912 = vld [vmem:[%s6 + $0x70] sm:$0xff]
        %v913 = vld [vmem:[%s6 + $0x78] sm:$0xff]
        %v914 = vld [vmem:[%s7] sm:$0x1]
        %v916 = vlaneseq
        %v917 = vshrl.u32 %v916, 7
        %v918 = vsub.s32 0, %v917
        %v919 = vrot.slane %v914, %v918
        %921 = vmatprep.subr.mxu0 0.0
        %922 = vmatpush1.msra.mxu0 %v898
        %923 = vmatprep.subr.mxu0 0.0
        %924 = vmatpush1.msra.mxu0 %v899
        %925 = vmatprep.subr.mxu0 0.0
        %926 = vmatpush1.msra.mxu0 %v900
        %927 = vmatprep.subr.mxu0 0.0
        %928 = vmatpush1.msra.mxu0 %v901
        %929 = vmatprep.subr.mxu0 0.0
        %930 = vmatpush1.msra.mxu0 %v902
        %931 = vmatprep.subr.mxu0 0.0
        %932 = vmatpush1.msra.mxu0 %v903
        %933 = vmatprep.subr.mxu0 0.0
        %934 = vmatpush1.msra.mxu0 %v904
        %935 = vmatprep.subr.mxu0 0.0
        %936 = vmatpush1.msra.mxu0 %v905
        %937 = vmatprep.subr.mxu0 0.0
        %938 = vmatpush1.msra.mxu0 %v906
        %939 = vmatprep.subr.mxu0 0.0
        %940 = vmatpush1.msra.mxu0 %v907
        %941 = vmatprep.subr.mxu0 0.0
        %942 = vmatpush1.msra.mxu0 %v908
        %943 = vmatprep.subr.mxu0 0.0
        %944 = vmatpush1.msra.mxu0 %v909
        %945 = vmatprep.subr.mxu0 0.0
        %946 = vmatpush1.msra.mxu0 %v910
        %947 = vmatprep.subr.mxu0 0.0
        %948 = vmatpush1.msra.mxu0 %v911
        %949 = vmatprep.subr.mxu0 0.0
        %950 = vmatpush1.msra.mxu0 %v912
        %951 = vmatprep.subr.mxu0 0.0
        %952 = vmatpush1.msra.mxu0 %v913
        %953 = vmatprep.subr.mxu0 0.0
        %954 = vmatpush1.msra.mxu0 0.0
        %955 = vmatprep.subr.mxu0 0.0
        %956 = vmatpush1.msra.mxu0 0.0
        %957 = vmatprep.subr.mxu0 0.0
        %958 = vmatpush1.msra.mxu0 0.0
        %959 = vmatprep.subr.mxu0 0.0
        %960 = vmatpush1.msra.mxu0 0.0
        %961 = vmatprep.subr.mxu0 0.0
        %962 = vmatpush1.msra.mxu0 0.0
        %963 = vmatprep.subr.mxu0 0.0
        %964 = vmatpush1.msra.mxu0 0.0
        %965 = vmatprep.subr.mxu0 0.0
        %966 = vmatpush1.msra.mxu0 0.0
        %967 = vmatprep.subr.mxu0 0.0
        %968 = vmatpush1.msra.mxu0 0.0
        %969 = vmatprep.subr.mxu0 0.0
        %970 = vmatpush1.msra.mxu0 0.0
        %971 = vmatprep.subr.mxu0 0.0
        %972 = vmatpush1.msra.mxu0 0.0
        %973 = vmatprep.subr.mxu0 0.0
        %974 = vmatpush1.msra.mxu0 0.0
        %975 = vmatprep.subr.mxu0 0.0
        %976 = vmatpush1.msra.mxu0 0.0
        %977 = vmatprep.subr.mxu0 0.0
        %978 = vmatpush1.msra.mxu0 0.0
        %979 = vmatprep.subr.mxu0 0.0
        %980 = vmatpush1.msra.mxu0 0.0
        %981 = vmatprep.subr.mxu0 0.0
        %982 = vmatpush1.msra.mxu0 0.0
        %983 = vmatprep.subr.mxu0 0.0
        %984 = vmatpush1.msra.mxu0 0.0
        %985 = vmatprep.mubr.f32.mxu0 0.0
        %986 = vmatmul.mubr.f32.gmra.mrb[0].mxu0 %v894
        %v987 = vpop.f32.mrb[0].mxu0
        %v988 = vadd.f32 %v919, %v987
        %v989 = vpop.f32.mrb[0].mxu0
        %990 = vmatprep.mubr.f32.mxu0 0.0
        %991 = vmatmul.mubr.f32.gmra.mrb[0].mxu0 %v895
        %v992 = vpop.f32.mrb[0].mxu0
        %v993 = vadd.f32 %v919, %v992
        %v994 = vpop.f32.mrb[0].mxu0
        %995 = vmatprep.mubr.f32.mxu0 0.0
        %996 = vmatmul.mubr.f32.gmra.mrb[0].mxu0 %v896
        %v997 = vpop.f32.mrb[0].mxu0
        %v998 = vadd.f32 %v919, %v997
        %v999 = vpop.f32.mrb[0].mxu0
        %1000 = vmatprep.mubr.f32.mxu0 0.0
        %1001 = vmatmul.mubr.f32.gmra.mrb[0].mxu0 %v897
        %v1002 = vpop.f32.mrb[0].mxu0
        %v1003 = vadd.f32 %v919, %v1002
        %v1004 = vpop.f32.mrb[0].mxu0
        %1005 = vdwg.mxu0
        %1006 = vst [vmem:[%s382] sm:$0xff] %v988
        %1007 = vst [vmem:[%s382 + $0x8] sm:$0xff] %v993
        %1008 = vst [vmem:[%s382 + $0x10] sm:$0xff] %v998
        %1009 = vst [vmem:[%s382 + $0x18] sm:$0xff] %v1003
      $region56: #{wavenet_forward.5} parent=47 // pred_fallthru
        _
      %p1010 = scmp.lt.s32.totalorder %s29, 1
      %s1011 = scalar_select %p1010, %s29, 1
      %s1012 = smul.addr %s1011, 4
      %s1013 = smul.addr %s1012, 8
      %s1014 = scalar_lea.vmem %s8, %s1013
      // Predicated region
      $region57: #{wavenet_forward.5} parent=47 // pred_check
        %p1015 = pneg %p229
      $region58: #{wavenet_forward.5} parent=47 // pred_check_branch
        %1017 = sbr.rel (%p1015) target = $region60
      $region59: #{wavenet_forward.5} parent=47 // pred_region
        _
      $region60: #{wavenet_forward.5} parent=47 // pred_fallthru
        _
    $region48: #{wavenet_forward.5} parent=5 // pred_fallthru
      _
    %p1018 = scmp.le.s32.totalorder 2, %s20
    // Predicated region
    $region61: #{wavenet_forward.5} parent=5 // pred_check
      %p1019 = pneg %p1018
    $region62: #{wavenet_forward.5} parent=5 // pred_check_branch
      %1021 = sbr.rel (%p1019) target = $region64
    $region63: #{wavenet_forward.5} parent=5 // pred_region
      %s1022 = ssub.s32 %s20, 2
      // Predicated region
      $region65: #{wavenet_forward.5} parent=63 // pred_check
        %p1023 = pneg %p235
      $region66: #{wavenet_forward.5} parent=63 // pred_check_branch
        %1025 = sbr.rel (%p1023) target = $region68
      $region67: #{wavenet_forward.5} parent=63 // pred_region
        %p1026 = scmp.lt.s32.totalorder %s31, 1
        %s1027 = scalar_select %p1026, %s31, 1
        %s1028 = smul.addr %s1027, 4
        %s1029 = smul.addr %s1028, 8
        %s1030 = scalar_lea.vmem %s8, %s1029
      $region68: #{wavenet_forward.5} parent=63 // pred_fallthru
        _
    $region64: #{wavenet_forward.5} parent=5 // pred_fallthru
      _
  $region6: #{wavenet_forward.5} parent=0 // loop_footer
    %s24 = sadd.s32 1, %s20
  $region7: #{wavenet_forward.5} parent=0 // loop_footer_branch
    %19 = sbr.rel target = $region3
  $region8: #{wavenet_forward.5} parent=0 // loop_exit
    _

</llo_original>
